<compile_context>
chip_gen: v6e
topology: v6e:2x2x1
jax: 0.10.0
libtpu: 0.0.40
codegen_flags: <defaults>
</compile_context>

<pallas_src>
import functools
import math

import jax
import jax.numpy as jnp
from jax import lax
from jax.experimental import pallas as pl
from jax.experimental.pallas import tpu as pltpu


def _layernorm(x, w, b, eps):
  mean = jnp.mean(x, axis=-1, keepdims=True)
  var = jnp.mean((x - mean) ** 2, axis=-1, keepdims=True)
  return (x - mean) * lax.rsqrt(var + eps) * w + b


def encoder_layer_kernel(x_ref,
                         n1w_ref, n1b_ref,
                         wq_ref, wkv_ref, wo_ref,
                         n2w_ref, n2b_ref,
                         w1_ref, b1_ref,
                         w2_ref, b2_ref,
                         out_ref,
                         k_sc, v_sc,
                         *, num_heads, head_dim, q_tile, eps):
  H, D, TQ = num_heads, head_dim, q_tile
  S = x_ref.shape[1]
  E = H * D

  n1w = n1w_ref[...]
  n1b = n1b_ref[...]

  # ---- K/V precompute: once per batch element (query-tile axis is inner) ----
  @pl.when(pl.program_id(1) == 0)
  def _fill_kv():
    xf = x_ref[0]                                                   # (S, E) f32
    hf = _layernorm(xf, n1w, n1b, eps).astype(jnp.bfloat16)
    kv = jnp.dot(hf, wkv_ref[...],
                 preferred_element_type=jnp.float32)                # (S, 2E) f32
    kv = kv.astype(jnp.bfloat16)                                    # single downcast
    k_sc[...] = kv[:, :E].reshape(S, H, D).transpose(1, 0, 2)       # (H, S, D)
    v_sc[...] = kv[:, E:].reshape(S, H, D).transpose(1, 0, 2)       # (H, S, D)

  # ---- query tile sliced out of the resident full-sequence block ----
  q_start = pl.multiple_of(pl.program_id(1) * TQ, TQ)
  xq = x_ref[0, pl.ds(q_start, TQ), :]                              # (TQ, E) f32

  # ---- self-attention block (pre-LayerNorm) ----
  # 1/sqrt(D) is folded into wq by the wrapper.
  hq = _layernorm(xq, n1w, n1b, eps).astype(jnp.bfloat16)
  q = jnp.dot(hq, wq_ref[...], preferred_element_type=jnp.float32)  # (TQ, E)
  q = q.astype(jnp.bfloat16).reshape(TQ, H, D).transpose(1, 0, 2)   # (H, TQ, D)

  s = jnp.einsum("hqd,hkd->hqk", q, k_sc[...],
                 preferred_element_type=jnp.float32)                # (H, TQ, S)
  s = s - jnp.max(s, axis=-1, keepdims=True)
  p = jnp.exp(s)
  l = jnp.sum(p, axis=-1, keepdims=True)                            # (H, TQ, 1)
  o = jnp.einsum("hqk,hkd->hqd", p.astype(jnp.bfloat16), v_sc[...],
                 preferred_element_type=jnp.float32)                # (H, TQ, D)
  o = o * pl.reciprocal(l)            # deferred softmax norm; exact is cheap here

  attn = o.transpose(1, 0, 2).reshape(TQ, E).astype(jnp.bfloat16)   # (TQ, E)
  sa = jnp.dot(attn, wo_ref[...], preferred_element_type=jnp.float32)

  x1 = xq + sa

  # ---- feed-forward block (pre-LayerNorm) ----
  h2 = _layernorm(x1, n2w_ref[...], n2b_ref[...], eps).astype(jnp.bfloat16)
  f = jnp.dot(h2, w1_ref[...], preferred_element_type=jnp.float32) + b1_ref[...]
  f = jnp.maximum(f, 0.0).astype(jnp.bfloat16)                      # relu
  f = jnp.dot(f, w2_ref[...], preferred_element_type=jnp.float32) + b2_ref[...]

  out_ref[0] = (x1 + f).astype(out_ref.dtype)


def _vmem_cap_bytes():
  """Physical VMEM per TensorCore; generation-aware with a safe fallback."""
  try:
    info = pltpu.get_tpu_info()
    for attr in ("vmem_capacity_bytes", "vmem_size_bytes", "vmem_bytes"):
      cap = getattr(info, attr, None)
      if cap:
        return int(cap)
  except Exception:  # pragma: no cover - hardware query not available
    pass
  return 64 * 2**20   # conservative (v7x-sized) fallback


def transformer_encoder_layer(x, raw, *, num_heads, eps=1e-6, q_tile=None):
  """x: (B, S, E) float32.  raw: torch-layout parameters (weights are (out, in)).

  Note: this module's layer_norm_eps default is 1e-6 (the WMT workload value);
  pass eps explicitly if comparing against stock nn.TransformerEncoderLayer.
  """
  B, S, E = x.shape
  F = raw["lin1_w"].shape[0]
  assert E % num_heads == 0
  D = E // num_heads

  # Query-tile size: biggest aligned divisor of S (big tiles amortize the
  # ~0.35us/step pipeline overhead); K/V is no longer recomputed per tile so
  # small tiles only cost step overhead, not extra MXU work.
  if q_tile is not None:
    TQ = q_tile
  else:
    TQ = S
    for cand in (512, 256, 128):
      if S % cand == 0:
        TQ = cand
        break
  assert S % TQ == 0, "q_tile must divide the sequence length"
  nq = S // TQ

  # ---- one-time host-side weight prep (transpose, scale-fold, bf16 cast) ----
  wqkv = raw["in_proj_w"].T                                          # (E, 3E)
  wq = (wqkv[:, :E] * (1.0 / math.sqrt(D))).astype(jnp.bfloat16)     # (E, E)
  wkv = wqkv[:, E:].astype(jnp.bfloat16)                             # (E, 2E)
  wo = raw["out_proj_w"].T.astype(jnp.bfloat16)                      # (E, E)
  w1 = raw["lin1_w"].T.astype(jnp.bfloat16)                          # (E, F)
  w2 = raw["lin2_w"].T.astype(jnp.bfloat16)                          # (F, E)
  b1 = raw["lin1_b"].reshape(1, F).astype(jnp.float32)
  b2 = raw["lin2_b"].reshape(1, E).astype(jnp.float32)
  n1w = raw["n1w"].reshape(1, E).astype(jnp.float32)
  n1b = raw["n1b"].reshape(1, E).astype(jnp.float32)
  n2w = raw["n2w"].reshape(1, E).astype(jnp.float32)
  n2b = raw["n2b"].reshape(1, E).astype(jnp.float32)

  weights = (n1w, n1b, wq, wkv, wo, n2w, n2b, w1, b1, w2, b2)
  param_bytes = sum(int(a.size) * a.dtype.itemsize for a in weights)

  # ---- VMEM budget (weights single-buffered; x/out blocks double-buffered;
  #      K/V scratch; in-kernel temporaries) ----
  lane = lambda n: max(n, 128)
  kv_scratch = 2 * num_heads * S * lane(D) * 2                       # bf16 K + V
  x_block = 2 * S * E * 4
  out_block = 2 * TQ * E * 4
  temporaries = (num_heads * TQ * S * (4 + 2)                        # scores + probs
                 + TQ * F * 6                                        # FFN mid f32+bf16
                 + S * 2 * E * 6                                     # kv f32+bf16 (fill)
                 + 8 * TQ * E * 4)                                   # q/attn/residuals
  need = param_bytes + kv_scratch + x_block + out_block + temporaries

  cap = _vmem_cap_bytes()
  vmem_limit = int(min(int(0.85 * cap), max(32 * 2**20, int(1.25 * need))))

  # ---- advisory cost estimate (K/V projection & x DMA counted ONCE/batch) ----
  flops = B * (8 * S * E * E + 4 * S * S * E + 4 * S * E * F)
  transcendentals = B * (num_heads * S * S + num_heads * S + 3 * S)
  bytes_accessed = int(2 * B * S * E * 4 + param_bytes)
  cost = pl.CostEstimate(flops=int(flops),
                         transcendentals=int(transcendentals),
                         bytes_accessed=bytes_accessed)

  # Weights: unblocked, VMEM-resident, single-buffered (fetched once).
  weight_specs = [pl.BlockSpec(memory_space=pltpu.MemorySpace.VMEM)
                  for _ in weights]

  kernel = functools.partial(encoder_layer_kernel, num_heads=num_heads,
                             head_dim=D, q_tile=TQ, eps=eps)

  # Batch axis "parallel" (megacore / dual-TC); query-tile axis "arbitrary" so
  # the K/V scratch filled at qi==0 is valid for all tiles of that batch elem.
  # (If per-chip batch were 1, precompute K/V outside and flip the roles.)
  return pl.pallas_call(
      kernel,
      out_shape=jax.ShapeDtypeStruct((B, S, E), x.dtype),
      grid_spec=pltpu.PrefetchScalarGridSpec(
          num_scalar_prefetch=0,
          grid=(B, nq),
          in_specs=[pl.BlockSpec((1, S, E), lambda b, qi: (b, 0, 0))]
                   + weight_specs,
          out_specs=pl.BlockSpec((1, TQ, E), lambda b, qi: (b, qi, 0)),
          scratch_shapes=[pltpu.VMEM((num_heads, S, D), jnp.bfloat16),   # K
                          pltpu.VMEM((num_heads, S, D), jnp.bfloat16)],  # V
      ),
      compiler_params=pltpu.CompilerParams(
          dimension_semantics=("parallel", "arbitrary"),
          vmem_limit_bytes=vmem_limit),
      cost_estimate=cost,
  )(x, *weights)


# -------------------- pure-JAX f32 reference for verification --------------------
def reference(x, raw, *, num_heads, eps=1e-6):
  B, S, E = x.shape
  D = E // num_heads

  def ln(v, w, b):
    m = jnp.mean(v, -1, keepdims=True)
    var = jnp.mean((v - m) ** 2, -1, keepdims=True)
    return (v - m) / jnp.sqrt(var + eps) * w + b

  h = ln(x, raw["n1w"], raw["n1b"])
  qkv = h @ raw["in_proj_w"].T
  q, k, v = qkv[..., :E], qkv[..., E:2 * E], qkv[..., 2 * E:]
  q = q.reshape(B, S, num_heads, D).transpose(0, 2, 1, 3)
  k = k.reshape(B, S, num_heads, D).transpose(0, 2, 1, 3)
  v = v.reshape(B, S, num_heads, D).transpose(0, 2, 1, 3)
  s = jnp.einsum("bhqd,bhkd->bhqk", q, k) / math.sqrt(D)
  p = jax.nn.softmax(s, axis=-1)
  a = jnp.einsum("bhqk,bhkd->bhqd", p, v).transpose(0, 2, 1, 3).reshape(B, S, E)
  x1 = x + a @ raw["out_proj_w"].T
  h2 = ln(x1, raw["n2w"], raw["n2b"])
  f = jnp.maximum(h2 @ raw["lin1_w"].T + raw["lin1_b"], 0.0) @ raw["lin2_w"].T \
      + raw["lin2_b"]
  return x1 + f


def xavier_uniform(key, shape_out_in):
  out_f, in_f = shape_out_in
  bound = math.sqrt(6.0 / (in_f + out_f))
  return jax.random.uniform(key, (out_f, in_f), jnp.float32, -bound, bound)


if __name__ == "__main__":
  # Small shapes consistent with the module's forward: (batch, seq, d_model).
  B, S, E, H, FF = 2, 16, 32, 4, 64
  key = jax.random.PRNGKey(0)
  ks = jax.random.split(key, 8)

  x = jax.random.normal(ks[0], (B, S, E), jnp.float32)

  # Torch-layout parameters (Linear weights are (out_features, in_features);
  # attn projections have no bias, linear1/linear2 have bias, LayerNorms affine).
  raw = {
      "in_proj_w": xavier_uniform(ks[1], (3 * E, E)),
      "out_proj_w": xavier_uniform(ks[2], (E, E)),
      "lin1_w": xavier_uniform(ks[3], (FF, E)),
      "lin1_b": jax.random.normal(ks[4], (FF,), jnp.float32) * 0.02,
      "lin2_w": xavier_uniform(ks[5], (E, FF)),
      "lin2_b": jax.random.normal(ks[6], (E,), jnp.float32) * 0.02,
      "n1w": jnp.ones((E,), jnp.float32), "n1b": jnp.zeros((E,), jnp.float32),
      "n2w": jnp.ones((E,), jnp.float32), "n2b": jnp.zeros((E,), jnp.float32),
  }

  # q_tile=8 exercises the (batch, query-tile) grid: 2 tiles per batch element,
  # i.e. the @pl.when(qi==0) K/V-scratch fill plus one reuse step.
  out = transformer_encoder_layer(x, raw, num_heads=H, q_tile=8)
  out = jax.block_until_ready(out)

  ref = reference(x, raw, num_heads=H)
  assert out.shape == (B, S, E) and out.dtype == jnp.float32
  err = float(jnp.max(jnp.abs(out - ref)))
  # bf16 matmul operands vs. an f32 reference (softmax/LN/residual are f32 and
  # the softmax reciprocal is exact): expected max abs error ~1e-2.
  assert err < 1e-1, f"max err {err}"

  print("KERNEL_OK")
</pallas_src>

<mosaic_0001>
module attributes {stable_mosaic.version = 11 : i64} {
  func.func @encoder_layer_kernel(%arg0: i32, %arg1: i32, %arg2: memref<1x16x32xf32, #tpu.memory_space<vmem>>, %arg3: memref<1x32xf32, #tpu.memory_space<vmem>>, %arg4: memref<1x32xf32, #tpu.memory_space<vmem>>, %arg5: memref<32x32xbf16, #tpu.memory_space<vmem>>, %arg6: memref<32x64xbf16, #tpu.memory_space<vmem>>, %arg7: memref<32x32xbf16, #tpu.memory_space<vmem>>, %arg8: memref<1x32xf32, #tpu.memory_space<vmem>>, %arg9: memref<1x32xf32, #tpu.memory_space<vmem>>, %arg10: memref<32x64xbf16, #tpu.memory_space<vmem>>, %arg11: memref<1x64xf32, #tpu.memory_space<vmem>>, %arg12: memref<64x32xbf16, #tpu.memory_space<vmem>>, %arg13: memref<1x32xf32, #tpu.memory_space<vmem>>, %arg14: memref<1x8x32xf32, #tpu.memory_space<vmem>>, %arg15: memref<4x16x8xbf16, #tpu.memory_space<vmem>>, %arg16: memref<4x16x8xbf16, #tpu.memory_space<vmem>>) attributes {dimension_semantics = [#tpu.dimension_semantics<parallel>, #tpu.dimension_semantics<arbitrary>], iteration_bounds = array<i64: 2, 2>, scalar_prefetch = 0 : i64, scratch_operands = 2 : i64, tpu.core_type = #tpu.core_type<tc>, window_params = [{transform_indices = @transform_0, window_bounds = array<i64: 1, 16, 32>}, {pipeline_mode = #tpu.pipeline_mode<synchronous>, transform_indices = @transform_1, window_bounds = array<i64: 1, 32>}, {pipeline_mode = #tpu.pipeline_mode<synchronous>, transform_indices = @transform_2, window_bounds = array<i64: 1, 32>}, {pipeline_mode = #tpu.pipeline_mode<synchronous>, transform_indices = @transform_3, window_bounds = array<i64: 32, 32>}, {pipeline_mode = #tpu.pipeline_mode<synchronous>, transform_indices = @transform_4, window_bounds = array<i64: 32, 64>}, {pipeline_mode = #tpu.pipeline_mode<synchronous>, transform_indices = @transform_5, window_bounds = array<i64: 32, 32>}, {pipeline_mode = #tpu.pipeline_mode<synchronous>, transform_indices = @transform_6, window_bounds = array<i64: 1, 32>}, {pipeline_mode = #tpu.pipeline_mode<synchronous>, transform_indices = @transform_7, window_bounds = array<i64: 1, 32>}, {pipeline_mode = #tpu.pipeline_mode<synchronous>, transform_indices = @transform_8, window_bounds = array<i64: 32, 64>}, {pipeline_mode = #tpu.pipeline_mode<synchronous>, transform_indices = @transform_9, window_bounds = array<i64: 1, 64>}, {pipeline_mode = #tpu.pipeline_mode<synchronous>, transform_indices = @transform_10, window_bounds = array<i64: 64, 32>}, {pipeline_mode = #tpu.pipeline_mode<synchronous>, transform_indices = @transform_11, window_bounds = array<i64: 1, 32>}, {transform_indices = @transform_12, window_bounds = array<i64: 1, 8, 32>}]} {
    %c0 = arith.constant 0 : index
    %c0_0 = arith.constant 0 : index
    %0 = vector.load %arg3[%c0, %c0_0] : memref<1x32xf32, #tpu.memory_space<vmem>>, vector<1x32xf32>
    %c0_1 = arith.constant 0 : index
    %c0_2 = arith.constant 0 : index
    %1 = vector.load %arg4[%c0_1, %c0_2] : memref<1x32xf32, #tpu.memory_space<vmem>>, vector<1x32xf32>
    %c0_i32 = arith.constant 0 : i32
    %2 = arith.cmpi eq, %arg1, %c0_i32 : i32
    %3 = arith.extui %2 : i1 to i32
    %c0_i32_3 = arith.constant 0 : i32
    %4 = arith.cmpi ne, %3, %c0_i32_3 : i32
    scf.if %4 {
      %c0_49 = arith.constant 0 : index
      %c0_50 = arith.constant 0 : index
      %c0_51 = arith.constant 0 : index
      %101 = vector.load %arg2[%c0_49, %c0_50, %c0_51] : memref<1x16x32xf32, #tpu.memory_space<vmem>>, vector<1x16x32xf32>
      %102 = vector.shape_cast %101 : vector<1x16x32xf32> to vector<16x32xf32>
      %cst_52 = arith.constant dense<0.000000e+00> : vector<16xf32>
      %103 = vector.multi_reduction <add>, %102, %cst_52 [1] : vector<16x32xf32> to vector<16xf32>
      %104 = vector.shape_cast %103 : vector<16xf32> to vector<16x1xf32>
      %cst_53 = arith.constant 3.200000e+01 : f32
      %105 = vector.broadcast %cst_53 : f32 to vector<16x1xf32>
      %106 = arith.divf %104, %105 : vector<16x1xf32>
      %107 = vector.broadcast %106 : vector<16x1xf32> to vector<16x32xf32>
      %108 = arith.subf %102, %107 : vector<16x32xf32>
      %109 = arith.mulf %108, %108 : vector<16x32xf32>
      %cst_54 = arith.constant dense<0.000000e+00> : vector<16xf32>
      %110 = vector.multi_reduction <add>, %109, %cst_54 [1] : vector<16x32xf32> to vector<16xf32>
      %111 = vector.shape_cast %110 : vector<16xf32> to vector<16x1xf32>
      %cst_55 = arith.constant 3.200000e+01 : f32
      %112 = vector.broadcast %cst_55 : f32 to vector<16x1xf32>
      %113 = arith.divf %111, %112 : vector<16x1xf32>
      %114 = vector.broadcast %106 : vector<16x1xf32> to vector<16x32xf32>
      %115 = arith.subf %102, %114 : vector<16x32xf32>
      %cst_56 = arith.constant 9.99999997E-7 : f32
      %116 = vector.broadcast %cst_56 : f32 to vector<16x1xf32>
      %117 = arith.addf %113, %116 : vector<16x1xf32>
      %118 = math.rsqrt %117 : vector<16x1xf32>
      %119 = vector.broadcast %118 : vector<16x1xf32> to vector<16x32xf32>
      %120 = arith.mulf %115, %119 : vector<16x32xf32>
      %121 = vector.broadcast %0 : vector<1x32xf32> to vector<16x32xf32>
      %122 = arith.mulf %120, %121 : vector<16x32xf32>
      %123 = vector.broadcast %1 : vector<1x32xf32> to vector<16x32xf32>
      %124 = arith.addf %122, %123 : vector<16x32xf32>
      %125 = arith.truncf %124 : vector<16x32xf32> to vector<16x32xbf16>
      %c0_57 = arith.constant 0 : index
      %c0_58 = arith.constant 0 : index
      %126 = vector.load %arg6[%c0_57, %c0_58] : memref<32x64xbf16, #tpu.memory_space<vmem>>, vector<32x64xbf16>
      %cst_59 = arith.constant dense<0.000000e+00> : vector<16x64xf32>
      %127 = tpu.matmul %125, %126, %cst_59 {dimension_numbers = #tpu.dot_dimension_numbers<[1], [0], [0], [1], [0, 0, 1, 1], [], []>} : vector<16x32xbf16>, vector<32x64xbf16>, vector<16x64xf32> -> vector<16x64xf32>
      %128 = arith.truncf %127 : vector<16x64xf32> to vector<16x64xbf16>
      %129 = vector.extract_strided_slice %128 {offsets = [0, 0], sizes = [16, 32], strides = [1, 1]} : vector<16x64xbf16> to vector<16x32xbf16>
      %130 = vector.shape_cast %129 : vector<16x32xbf16> to vector<16x4x8xbf16>
      %131 = tpu.transpose %130, [1, 0, 2] : vector<16x4x8xbf16> -> vector<4x16x8xbf16>
      %c0_60 = arith.constant 0 : index
      %c0_61 = arith.constant 0 : index
      %c0_62 = arith.constant 0 : index
      %132 = vector.load %arg15[%c0_60, %c0_61, %c0_62] : memref<4x16x8xbf16, #tpu.memory_space<vmem>>, vector<4x16x8xbf16>
      tpu.vector_store %arg15[%c0_60, %c0_61, %c0_62], %131 {strides = array<i32>} : memref<4x16x8xbf16, #tpu.memory_space<vmem>>, vector<4x16x8xbf16>,
      %133 = vector.extract_strided_slice %128 {offsets = [0, 32], sizes = [16, 32], strides = [1, 1]} : vector<16x64xbf16> to vector<16x32xbf16>
      %134 = vector.shape_cast %133 : vector<16x32xbf16> to vector<16x4x8xbf16>
      %135 = tpu.transpose %134, [1, 0, 2] : vector<16x4x8xbf16> -> vector<4x16x8xbf16>
      %c0_63 = arith.constant 0 : index
      %c0_64 = arith.constant 0 : index
      %c0_65 = arith.constant 0 : index
      %136 = vector.load %arg16[%c0_63, %c0_64, %c0_65] : memref<4x16x8xbf16, #tpu.memory_space<vmem>>, vector<4x16x8xbf16>
      tpu.vector_store %arg16[%c0_63, %c0_64, %c0_65], %135 {strides = array<i32>} : memref<4x16x8xbf16, #tpu.memory_space<vmem>>, vector<4x16x8xbf16>,
    } else {
    }
    %c8_i32 = arith.constant 8 : i32
    %5 = arith.muli %arg1, %c8_i32 : i32
    %6 = tpu.assume_multiple %5, 8 : i32
    %c0_4 = arith.constant 0 : index
    %7 = arith.index_cast %6 : i32 to index
    %c0_5 = arith.constant 0 : index
    %8 = vector.load %arg2[%c0_4, %7, %c0_5] : memref<1x16x32xf32, #tpu.memory_space<vmem>>, vector<1x8x32xf32>
    %9 = vector.shape_cast %8 : vector<1x8x32xf32> to vector<8x32xf32>
    %cst = arith.constant dense<0.000000e+00> : vector<8xf32>
    %10 = vector.multi_reduction <add>, %9, %cst [1] : vector<8x32xf32> to vector<8xf32>
    %11 = vector.shape_cast %10 : vector<8xf32> to vector<8x1xf32>
    %cst_6 = arith.constant 3.200000e+01 : f32
    %12 = vector.broadcast %cst_6 : f32 to vector<8x1xf32>
    %13 = arith.divf %11, %12 : vector<8x1xf32>
    %14 = vector.broadcast %13 : vector<8x1xf32> to vector<8x32xf32>
    %15 = arith.subf %9, %14 : vector<8x32xf32>
    %16 = arith.mulf %15, %15 : vector<8x32xf32>
    %cst_7 = arith.constant dense<0.000000e+00> : vector<8xf32>
    %17 = vector.multi_reduction <add>, %16, %cst_7 [1] : vector<8x32xf32> to vector<8xf32>
    %18 = vector.shape_cast %17 : vector<8xf32> to vector<8x1xf32>
    %cst_8 = arith.constant 3.200000e+01 : f32
    %19 = vector.broadcast %cst_8 : f32 to vector<8x1xf32>
    %20 = arith.divf %18, %19 : vector<8x1xf32>
    %21 = vector.broadcast %13 : vector<8x1xf32> to vector<8x32xf32>
    %22 = arith.subf %9, %21 : vector<8x32xf32>
    %cst_9 = arith.constant 9.99999997E-7 : f32
    %23 = vector.broadcast %cst_9 : f32 to vector<8x1xf32>
    %24 = arith.addf %20, %23 : vector<8x1xf32>
    %25 = math.rsqrt %24 : vector<8x1xf32>
    %26 = vector.broadcast %25 : vector<8x1xf32> to vector<8x32xf32>
    %27 = arith.mulf %22, %26 : vector<8x32xf32>
    %28 = vector.broadcast %0 : vector<1x32xf32> to vector<8x32xf32>
    %29 = arith.mulf %27, %28 : vector<8x32xf32>
    %30 = vector.broadcast %1 : vector<1x32xf32> to vector<8x32xf32>
    %31 = arith.addf %29, %30 : vector<8x32xf32>
    %32 = arith.truncf %31 : vector<8x32xf32> to vector<8x32xbf16>
    %c0_10 = arith.constant 0 : index
    %c0_11 = arith.constant 0 : index
    %33 = vector.load %arg5[%c0_10, %c0_11] : memref<32x32xbf16, #tpu.memory_space<vmem>>, vector<32x32xbf16>
    %cst_12 = arith.constant dense<0.000000e+00> : vector<8x32xf32>
    %34 = tpu.matmul %32, %33, %cst_12 {dimension_numbers = #tpu.dot_dimension_numbers<[1], [0], [0], [1], [0, 0, 1, 1], [], []>} : vector<8x32xbf16>, vector<32x32xbf16>, vector<8x32xf32> -> vector<8x32xf32>
    %35 = arith.truncf %34 : vector<8x32xf32> to vector<8x32xbf16>
    %36 = vector.shape_cast %35 : vector<8x32xbf16> to vector<8x4x8xbf16>
    %37 = tpu.transpose %36, [1, 0, 2] : vector<8x4x8xbf16> -> vector<4x8x8xbf16>
    %c0_13 = arith.constant 0 : index
    %c0_14 = arith.constant 0 : index
    %c0_15 = arith.constant 0 : index
    %38 = vector.load %arg15[%c0_13, %c0_14, %c0_15] : memref<4x16x8xbf16, #tpu.memory_space<vmem>>, vector<4x16x8xbf16>
    "tpu.trace_start"() <{level = 10 : i32, message = "hqd,hkd->hqk"}> : () -> ()
    %cst_16 = arith.constant dense<0.000000e+00> : vector<4x8x16xf32>
    %39 = tpu.matmul %37, %38, %cst_16 {dimension_numbers = #tpu.dot_dimension_numbers<[2], [2], [1], [1], [0, 0, 0, 1, 1, 1], [0], [0]>} : vector<4x8x8xbf16>, vector<4x16x8xbf16>, vector<4x8x16xf32> -> vector<4x8x16xf32>
    "tpu.trace_stop"() : () -> ()
    %cst_17 = arith.constant dense<0xFF800000> : vector<4x8xf32>
    %40 = vector.multi_reduction <maximumf>, %39, %cst_17 [2] : vector<4x8x16xf32> to vector<4x8xf32>
    %41 = vector.shape_cast %40 : vector<4x8xf32> to vector<4x8x1xf32>
    %42 = vector.broadcast %41 : vector<4x8x1xf32> to vector<4x8x16xf32>
    %43 = arith.subf %39, %42 : vector<4x8x16xf32>
    %44 = math.exp %43 : vector<4x8x16xf32>
    %cst_18 = arith.constant dense<0.000000e+00> : vector<4x8xf32>
    %45 = vector.multi_reduction <add>, %44, %cst_18 [2] : vector<4x8x16xf32> to vector<4x8xf32>
    %46 = vector.shape_cast %45 : vector<4x8xf32> to vector<4x8x1xf32>
    %47 = arith.truncf %44 : vector<4x8x16xf32> to vector<4x8x16xbf16>
    %c0_19 = arith.constant 0 : index
    %c0_20 = arith.constant 0 : index
    %c0_21 = arith.constant 0 : index
    %48 = vector.load %arg16[%c0_19, %c0_20, %c0_21] : memref<4x16x8xbf16, #tpu.memory_space<vmem>>, vector<4x16x8xbf16>
    "tpu.trace_start"() <{level = 10 : i32, message = "hqk,hkd->hqd"}> : () -> ()
    %cst_22 = arith.constant dense<0.000000e+00> : vector<4x8x8xf32>
    %49 = tpu.matmul %47, %48, %cst_22 {dimension_numbers = #tpu.dot_dimension_numbers<[2], [1], [1], [2], [0, 0, 0, 1, 1, 2], [0], [0]>} : vector<4x8x16xbf16>, vector<4x16x8xbf16>, vector<4x8x8xf32> -> vector<4x8x8xf32>
    "tpu.trace_stop"() : () -> ()
    %50 = tpu.reciprocal %46 : vector<4x8x1xf32> -> vector<4x8x1xf32>
    %51 = vector.broadcast %50 : vector<4x8x1xf32> to vector<4x8x8xf32>
    %52 = arith.mulf %49, %51 : vector<4x8x8xf32>
    %53 = tpu.transpose %52, [1, 0, 2] : vector<4x8x8xf32> -> vector<8x4x8xf32>
    %54 = vector.shape_cast %53 : vector<8x4x8xf32> to vector<8x32xf32>
    %55 = arith.truncf %54 : vector<8x32xf32> to vector<8x32xbf16>
    %c0_23 = arith.constant 0 : index
    %c0_24 = arith.constant 0 : index
    %56 = vector.load %arg7[%c0_23, %c0_24] : memref<32x32xbf16, #tpu.memory_space<vmem>>, vector<32x32xbf16>
    %cst_25 = arith.constant dense<0.000000e+00> : vector<8x32xf32>
    %57 = tpu.matmul %55, %56, %cst_25 {dimension_numbers = #tpu.dot_dimension_numbers<[1], [0], [0], [1], [0, 0, 1, 1], [], []>} : vector<8x32xbf16>, vector<32x32xbf16>, vector<8x32xf32> -> vector<8x32xf32>
    %58 = arith.addf %9, %57 : vector<8x32xf32>
    %c0_26 = arith.constant 0 : index
    %c0_27 = arith.constant 0 : index
    %59 = vector.load %arg8[%c0_26, %c0_27] : memref<1x32xf32, #tpu.memory_space<vmem>>, vector<1x32xf32>
    %c0_28 = arith.constant 0 : index
    %c0_29 = arith.constant 0 : index
    %60 = vector.load %arg9[%c0_28, %c0_29] : memref<1x32xf32, #tpu.memory_space<vmem>>, vector<1x32xf32>
    %cst_30 = arith.constant dense<0.000000e+00> : vector<8xf32>
    %61 = vector.multi_reduction <add>, %58, %cst_30 [1] : vector<8x32xf32> to vector<8xf32>
    %62 = vector.shape_cast %61 : vector<8xf32> to vector<8x1xf32>
    %cst_31 = arith.constant 3.200000e+01 : f32
    %63 = vector.broadcast %cst_31 : f32 to vector<8x1xf32>
    %64 = arith.divf %62, %63 : vector<8x1xf32>
    %65 = vector.broadcast %64 : vector<8x1xf32> to vector<8x32xf32>
    %66 = arith.subf %58, %65 : vector<8x32xf32>
    %67 = arith.mulf %66, %66 : vector<8x32xf32>
    %cst_32 = arith.constant dense<0.000000e+00> : vector<8xf32>
    %68 = vector.multi_reduction <add>, %67, %cst_32 [1] : vector<8x32xf32> to vector<8xf32>
    %69 = vector.shape_cast %68 : vector<8xf32> to vector<8x1xf32>
    %cst_33 = arith.constant 3.200000e+01 : f32
    %70 = vector.broadcast %cst_33 : f32 to vector<8x1xf32>
    %71 = arith.divf %69, %70 : vector<8x1xf32>
    %72 = vector.broadcast %64 : vector<8x1xf32> to vector<8x32xf32>
    %73 = arith.subf %58, %72 : vector<8x32xf32>
    %cst_34 = arith.constant 9.99999997E-7 : f32
    %74 = vector.broadcast %cst_34 : f32 to vector<8x1xf32>
    %75 = arith.addf %71, %74 : vector<8x1xf32>
    %76 = math.rsqrt %75 : vector<8x1xf32>
    %77 = vector.broadcast %76 : vector<8x1xf32> to vector<8x32xf32>
    %78 = arith.mulf %73, %77 : vector<8x32xf32>
    %79 = vector.broadcast %59 : vector<1x32xf32> to vector<8x32xf32>
    %80 = arith.mulf %78, %79 : vector<8x32xf32>
    %81 = vector.broadcast %60 : vector<1x32xf32> to vector<8x32xf32>
    %82 = arith.addf %80, %81 : vector<8x32xf32>
    %83 = arith.truncf %82 : vector<8x32xf32> to vector<8x32xbf16>
    %c0_35 = arith.constant 0 : index
    %c0_36 = arith.constant 0 : index
    %84 = vector.load %arg10[%c0_35, %c0_36] : memref<32x64xbf16, #tpu.memory_space<vmem>>, vector<32x64xbf16>
    %cst_37 = arith.constant dense<0.000000e+00> : vector<8x64xf32>
    %85 = tpu.matmul %83, %84, %cst_37 {dimension_numbers = #tpu.dot_dimension_numbers<[1], [0], [0], [1], [0, 0, 1, 1], [], []>} : vector<8x32xbf16>, vector<32x64xbf16>, vector<8x64xf32> -> vector<8x64xf32>
    %c0_38 = arith.constant 0 : index
    %c0_39 = arith.constant 0 : index
    %86 = vector.load %arg11[%c0_38, %c0_39] : memref<1x64xf32, #tpu.memory_space<vmem>>, vector<1x64xf32>
    %87 = vector.broadcast %86 : vector<1x64xf32> to vector<8x64xf32>
    %88 = arith.addf %85, %87 : vector<8x64xf32>
    %cst_40 = arith.constant 0.000000e+00 : f32
    %89 = vector.broadcast %cst_40 : f32 to vector<8x64xf32>
    %90 = arith.maximumf %88, %89 : vector<8x64xf32>
    %91 = arith.truncf %90 : vector<8x64xf32> to vector<8x64xbf16>
    %c0_41 = arith.constant 0 : index
    %c0_42 = arith.constant 0 : index
    %92 = vector.load %arg12[%c0_41, %c0_42] : memref<64x32xbf16, #tpu.memory_space<vmem>>, vector<64x32xbf16>
    %cst_43 = arith.constant dense<0.000000e+00> : vector<8x32xf32>
    %93 = tpu.matmul %91, %92, %cst_43 {dimension_numbers = #tpu.dot_dimension_numbers<[1], [0], [0], [1], [0, 0, 1, 1], [], []>} : vector<8x64xbf16>, vector<64x32xbf16>, vector<8x32xf32> -> vector<8x32xf32>
    %c0_44 = arith.constant 0 : index
    %c0_45 = arith.constant 0 : index
    %94 = vector.load %arg13[%c0_44, %c0_45] : memref<1x32xf32, #tpu.memory_space<vmem>>, vector<1x32xf32>
    %95 = vector.broadcast %94 : vector<1x32xf32> to vector<8x32xf32>
    %96 = arith.addf %93, %95 : vector<8x32xf32>
    %97 = arith.addf %58, %96 : vector<8x32xf32>
    %c0_46 = arith.constant 0 : index
    %c0_47 = arith.constant 0 : index
    %c0_48 = arith.constant 0 : index
    %98 = vector.load %arg14[%c0_46, %c0_47, %c0_48] : memref<1x8x32xf32, #tpu.memory_space<vmem>>, vector<1x8x32xf32>
    %99 = vector.shape_cast %98 : vector<1x8x32xf32> to vector<8x32xf32>
    %100 = vector.shape_cast %97 : vector<8x32xf32> to vector<1x8x32xf32>
    tpu.vector_store %arg14[%c0_46, %c0_47, %c0_48], %100 {strides = array<i32>} : memref<1x8x32xf32, #tpu.memory_space<vmem>>, vector<1x8x32xf32>,
    return
  }
  func.func @transform_0(%arg0: i32, %arg1: i32) -> (i32, i32, i32) {
    %c0_i32 = arith.constant 0 : i32
    %c0_i32_0 = arith.constant 0 : i32
    %c0_i32_1 = arith.constant 0 : i32
    return %arg0, %c0_i32, %c0_i32_0 : i32, i32, i32
  }
  func.func @transform_1(%arg0: i32, %arg1: i32) -> (i32, i32) {
    %c0_i32 = arith.constant 0 : i32
    %c0_i32_0 = arith.constant 0 : i32
    %c0_i32_1 = arith.constant 0 : i32
    return %c0_i32, %c0_i32_0 : i32, i32
  }
  func.func @transform_2(%arg0: i32, %arg1: i32) -> (i32, i32) {
    %c0_i32 = arith.constant 0 : i32
    %c0_i32_0 = arith.constant 0 : i32
    %c0_i32_1 = arith.constant 0 : i32
    return %c0_i32, %c0_i32_0 : i32, i32
  }
  func.func @transform_3(%arg0: i32, %arg1: i32) -> (i32, i32) {
    %c0_i32 = arith.constant 0 : i32
    %c0_i32_0 = arith.constant 0 : i32
    %c0_i32_1 = arith.constant 0 : i32
    return %c0_i32, %c0_i32_0 : i32, i32
  }
  func.func @transform_4(%arg0: i32, %arg1: i32) -> (i32, i32) {
    %c0_i32 = arith.constant 0 : i32
    %c0_i32_0 = arith.constant 0 : i32
    %c0_i32_1 = arith.constant 0 : i32
    return %c0_i32, %c0_i32_0 : i32, i32
  }
  func.func @transform_5(%arg0: i32, %arg1: i32) -> (i32, i32) {
    %c0_i32 = arith.constant 0 : i32
    %c0_i32_0 = arith.constant 0 : i32
    %c0_i32_1 = arith.constant 0 : i32
    return %c0_i32, %c0_i32_0 : i32, i32
  }
  func.func @transform_6(%arg0: i32, %arg1: i32) -> (i32, i32) {
    %c0_i32 = arith.constant 0 : i32
    %c0_i32_0 = arith.constant 0 : i32
    %c0_i32_1 = arith.constant 0 : i32
    return %c0_i32, %c0_i32_0 : i32, i32
  }
  func.func @transform_7(%arg0: i32, %arg1: i32) -> (i32, i32) {
    %c0_i32 = arith.constant 0 : i32
    %c0_i32_0 = arith.constant 0 : i32
    %c0_i32_1 = arith.constant 0 : i32
    return %c0_i32, %c0_i32_0 : i32, i32
  }
  func.func @transform_8(%arg0: i32, %arg1: i32) -> (i32, i32) {
    %c0_i32 = arith.constant 0 : i32
    %c0_i32_0 = arith.constant 0 : i32
    %c0_i32_1 = arith.constant 0 : i32
    return %c0_i32, %c0_i32_0 : i32, i32
  }
  func.func @transform_9(%arg0: i32, %arg1: i32) -> (i32, i32) {
    %c0_i32 = arith.constant 0 : i32
    %c0_i32_0 = arith.constant 0 : i32
    %c0_i32_1 = arith.constant 0 : i32
    return %c0_i32, %c0_i32_0 : i32, i32
  }
  func.func @transform_10(%arg0: i32, %arg1: i32) -> (i32, i32) {
    %c0_i32 = arith.constant 0 : i32
    %c0_i32_0 = arith.constant 0 : i32
    %c0_i32_1 = arith.constant 0 : i32
    return %c0_i32, %c0_i32_0 : i32, i32
  }
  func.func @transform_11(%arg0: i32, %arg1: i32) -> (i32, i32) {
    %c0_i32 = arith.constant 0 : i32
    %c0_i32_0 = arith.constant 0 : i32
    %c0_i32_1 = arith.constant 0 : i32
    return %c0_i32, %c0_i32_0 : i32, i32
  }
  func.func @transform_12(%arg0: i32, %arg1: i32) -> (i32, i32, i32) {
    %c0_i32 = arith.constant 0 : i32
    %c0_i32_0 = arith.constant 0 : i32
    return %arg0, %arg1, %c0_i32 : i32, i32, i32
  }
}

</mosaic_0001>

<llo_original>
// kernel: tpu_custom_call.1
$region0: #{tpu_custom_call.1}
  #allocation0 [shape = 'u32[]', space=smem, size = 0x4, offset = 0x4, fixed_abs, tag = 'smem constant byte address 0x4 - core index']
  #allocation1 [shape = 'u32[144,128]{1,0:T(1,128)}', space=vmem, size = 0x12000, scoped, tag = 'internal scratch']
  #allocation2 [shape = 'bf16[4,16,8]{2,1,0:T(8,128)(2,1)}', space=vmem, size = 0x4000, scoped, tag = 'scratch operand']
  #allocation3 [shape = 'bf16[4,16,8]{2,1,0:T(8,128)(2,1)}', space=vmem, size = 0x4000, scoped, tag = 'scratch operand']
  %s0 = inlined_call_operand.vmem [shape: f32[2,16,32], index: 0, kind: input, shape index: {}]
  %s1 = inlined_call_operand.vmem [shape: f32[1,32], index: 1, kind: input, shape index: {}]
  %s2 = inlined_call_operand.vmem [shape: f32[1,32], index: 2, kind: input, shape index: {}]
  %s3 = inlined_call_operand.vmem [shape: bf16[32,32], index: 3, kind: input, shape index: {}]
  %s4 = inlined_call_operand.hbm [shape: bf16[32,64], index: 4, kind: input, shape index: {}]
  %s5 = inlined_call_operand.hbm [shape: bf16[32,32], index: 5, kind: input, shape index: {}]
  %s6 = inlined_call_operand.hbm [shape: f32[1,32], index: 6, kind: input, shape index: {}]
  %s7 = inlined_call_operand.hbm [shape: f32[1,32], index: 7, kind: input, shape index: {}]
  %s8 = inlined_call_operand.hbm [shape: bf16[32,64], index: 8, kind: input, shape index: {}]
  %s9 = inlined_call_operand.hbm [shape: f32[1,64], index: 9, kind: input, shape index: {}]
  %s10 = inlined_call_operand.vmem [shape: bf16[64,32], index: 10, kind: input, shape index: {}]
  %s11 = inlined_call_operand.vmem [shape: f32[1,32], index: 11, kind: input, shape index: {}]
  %s12 = inlined_call_operand.hbm [shape: f32[2,16,32], index: 12, kind: output, shape index: {}]
  %s13 = sld [smem:[#allocation0]]
  $region109: #{tpu_custom_call.1} parent=0
    _
  %s15 = ssub.s32 1, %s13
  %s16 = scalar_select 0, %s15, %s13
  $region1: #{tpu_custom_call.1} parent=0
    #allocation4 [shape = 'u8[8192]{0}', space=vmem, size = 0x2000, scoped, tag = 'input window, operand 4, single buffered']
    #allocation5 [shape = 's32[2]{0}', space=sflag, size = 0x8, scoped, tag = 'scoped memory for tpu_custom_call.1']
    #allocation6 [shape = 's32[2]{0}', space=sflag, size = 0x8, scoped, tag = 'scoped memory for tpu_custom_call.1']
    #allocation7 [shape = 'u8[8192]{0}', space=vmem, size = 0x2000, scoped, tag = 'input window, operand 5, single buffered']
    #allocation8 [shape = 's32[1]{0}', space=sflag, size = 0x4, scoped, tag = 'scoped memory for tpu_custom_call.1']
    #allocation9 [shape = 'u8[512]{0}', space=vmem, size = 0x400, scoped, tag = 'input window, operand 6, single buffered']
    #allocation10 [shape = 'u8[512]{0}', space=vmem, size = 0x400, scoped, tag = 'input window, operand 7, single buffered']
    #allocation11 [shape = 's32[1]{0}', space=sflag, size = 0x4, scoped, tag = 'scoped memory for tpu_custom_call.1']
    #allocation12 [shape = 'u8[8192]{0}', space=vmem, size = 0x2000, scoped, tag = 'input window, operand 8, single buffered']
    #allocation13 [shape = 'u8[512]{0}', space=vmem, size = 0x400, scoped, tag = 'input window, operand 9, single buffered']
    #allocation14 [shape = 's32[1]{0}', space=sflag, size = 0x4, scoped, tag = 'scoped memory for tpu_custom_call.1']
    #allocation15 [shape = 'u8[8192]{0}', space=vmem, size = 0x2000, scoped, tag = 'output window, operand 0']
    %17 = vsyncpa [#allocation5], 0
    %18 = vsyncpa [#allocation8], 0
    %19 = vsyncpa [#allocation11], 0
    %20 = vsyncpa [#allocation14], 0
    %21 = vsyncpa [#allocation6], 0
    %s22 = scalar_lea.sflag [#allocation6], 1
    %23 = vsyncpa %s22, 0
    loop: start=0, step=1, limit=6
    $region2: #{tpu_custom_call.1} parent=1 // loop_pre_header
      _
    $region3: #{tpu_custom_call.1} parent=1 // loop_header
      %s25 = sphi 0, %s29
      %p26 = scmp.ge.s32.totalorder %s25, 6
      %s32 = sphi 0, %s44
      %s33 = sphi 0, %s40
      %s34 = sphi 0, %s32
      %s35 = sphi 0, %s33
      %s36 = sphi 0, %s34
      %s37 = sphi 0, %s35
      %s47 = sphi 0, %s49
      %s50 = sphi 0, %s47
      %s51 = sphi 0, %s50
      %s67 = sphi 0, %s51
      %s71 = sphi 0, %s71
      %s73 = sphi 0, %s71
      %s74 = sphi 0, %s73
      %s88 = sphi 0, %s74
      %s92 = sphi 0, %s92
      %s94 = sphi 0, %s92
      %s95 = sphi 0, %s94
      %s109 = sphi 0, %s95
      %s113 = sphi 0, %s113
      %s115 = sphi 0, %s113
      %s116 = sphi 0, %s115
      %s130 = sphi 0, %s116
      %s134 = sphi 0, %s134
      %s136 = sphi 0, %s134
      %s137 = sphi 0, %s136
      %s151 = sphi 0, %s137
      %s155 = sphi 0, %s155
      %s157 = sphi 0, %s155
      %s158 = sphi 0, %s157
      %s172 = sphi 0, %s158
      %s176 = sphi 0, %s176
      %s178 = sphi 0, %s176
      %s179 = sphi 0, %s178
      %s193 = sphi 0, %s179
      %s197 = sphi 0, %s197
      %s199 = sphi 0, %s197
      %s200 = sphi 0, %s199
      %s214 = sphi 0, %s200
      %s218 = sphi 0, %s218
      %s220 = sphi 0, %s218
      %s221 = sphi 0, %s220
      %s235 = sphi 0, %s221
      %s239 = sphi 0, %s239
      %s241 = sphi 0, %s239
      %s242 = sphi 0, %s241
      %s256 = sphi 0, %s242
      %s260 = sphi 0, %s260
      %s262 = sphi 0, %s260
      %s263 = sphi 0, %s262
      %s277 = sphi 0, %s263
      %s281 = sphi 0, %s281
      %s283 = sphi 0, %s281
      %s284 = sphi 0, %s283
      %s298 = sphi 0, %s284
      %s306 = sphi 0, %s308
      %s309 = sphi 0, %s306
      %s310 = sphi 0, %s309
      %s326 = sphi 0, %s310
    $region4: #{tpu_custom_call.1} parent=1 // loop_header_branch
      %28 = sbr.rel (%p26) target = $region8
    $region5: #{tpu_custom_call.1} parent=1 // loop_body
      %s30 = ssub.s32 %s25, 1
      %s31 = ssub.s32 %s25, 2
      %s38 = sadd.s32 1, %s33
      %p39 = scmp.ge.s32.totalorder %s38, 2
      %s40 = scalar_select %p39, 0, %s38
      %s41 = sadd.s32 1, %s32
      %s42 = scalar_select %p39, %s41, %s32
      %p43 = scmp.ge.s32.totalorder %s42, 2
      %s44 = scalar_select %p43, 0, %s42
      %s45 = ssub.s32 %s32, %s44
      %p46 = scmp.eq.s32.totalorder %s45, 0
      %s48 = sadd.s32 %s47, 1
      %s49 = scalar_select %p46, %s47, %s48
      %p52 = pneg %p46
      %p53 = scmp.eq.s32.totalorder %s25, 3
      %p54 = por %p52, %p53
      %p55 = scmp.ne.s32.totalorder %s47, %s50
      %p56 = scmp.eq.s32.totalorder %s25, 0
      %p57 = por %p55, %p56
      %p58 = scmp.ne.s32.totalorder %s47, %s50
      %p59 = scmp.eq.s32.totalorder %s30, 3
      %p60 = por %p58, %p59
      %p61 = scmp.ne.s32.totalorder %s50, %s51
      %p62 = scmp.eq.s32.totalorder %s30, 0
      %p63 = por %p61, %p62
      %p64 = scmp.ne.s32.totalorder %s50, %s51
      %p65 = scmp.eq.s32.totalorder %s31, 3
      %p66 = por %p64, %p65
      %p68 = scmp.ne.s32.totalorder %s51, %s67
      %p69 = scmp.eq.s32.totalorder %s31, 0
      %p70 = por %p68, %p69
      %s72 = sadd.s32 %s71, 1
      %p75 = scmp.eq.s32.totalorder %s25, 3
      %p76 = scmp.ne.s32.totalorder %s71, %s73
      %p77 = scmp.eq.s32.totalorder %s25, 0
      %p78 = por %p76, %p77
      %p79 = scmp.ne.s32.totalorder %s71, %s73
      %p80 = scmp.eq.s32.totalorder %s30, 3
      %p81 = por %p79, %p80
      %p82 = scmp.ne.s32.totalorder %s73, %s74
      %p83 = scmp.eq.s32.totalorder %s30, 0
      %p84 = por %p82, %p83
      %p85 = scmp.ne.s32.totalorder %s73, %s74
      %p86 = scmp.eq.s32.totalorder %s31, 3
      %p87 = por %p85, %p86
      %p89 = scmp.ne.s32.totalorder %s74, %s88
      %p90 = scmp.eq.s32.totalorder %s31, 0
      %p91 = por %p89, %p90
      %s93 = sadd.s32 %s92, 1
      %p96 = scmp.eq.s32.totalorder %s25, 3
      %p97 = scmp.ne.s32.totalorder %s92, %s94
      %p98 = scmp.eq.s32.totalorder %s25, 0
      %p99 = por %p97, %p98
      %p100 = scmp.ne.s32.totalorder %s92, %s94
      %p101 = scmp.eq.s32.totalorder %s30, 3
      %p102 = por %p100, %p101
      %p103 = scmp.ne.s32.totalorder %s94, %s95
      %p104 = scmp.eq.s32.totalorder %s30, 0
      %p105 = por %p103, %p104
      %p106 = scmp.ne.s32.totalorder %s94, %s95
      %p107 = scmp.eq.s32.totalorder %s31, 3
      %p108 = por %p106, %p107
      %p110 = scmp.ne.s32.totalorder %s95, %s109
      %p111 = scmp.eq.s32.totalorder %s31, 0
      %p112 = por %p110, %p111
      %s114 = sadd.s32 %s113, 1
      %p117 = scmp.eq.s32.totalorder %s25, 3
      %p118 = scmp.ne.s32.totalorder %s113, %s115
      %p119 = scmp.eq.s32.totalorder %s25, 0
      %p120 = por %p118, %p119
      %p121 = scmp.ne.s32.totalorder %s113, %s115
      %p122 = scmp.eq.s32.totalorder %s30, 3
      %p123 = por %p121, %p122
      %p124 = scmp.ne.s32.totalorder %s115, %s116
      %p125 = scmp.eq.s32.totalorder %s30, 0
      %p126 = por %p124, %p125
      %p127 = scmp.ne.s32.totalorder %s115, %s116
      %p128 = scmp.eq.s32.totalorder %s31, 3
      %p129 = por %p127, %p128
      %p131 = scmp.ne.s32.totalorder %s116, %s130
      %p132 = scmp.eq.s32.totalorder %s31, 0
      %p133 = por %p131, %p132
      %s135 = sadd.s32 %s134, 1
      %p138 = scmp.eq.s32.totalorder %s25, 3
      %p139 = scmp.ne.s32.totalorder %s134, %s136
      %p140 = scmp.eq.s32.totalorder %s25, 0
      %p141 = por %p139, %p140
      %p142 = scmp.ne.s32.totalorder %s134, %s136
      %p143 = scmp.eq.s32.totalorder %s30, 3
      %p144 = por %p142, %p143
      %p145 = scmp.ne.s32.totalorder %s136, %s137
      %p146 = scmp.eq.s32.totalorder %s30, 0
      %p147 = por %p145, %p146
      %p148 = scmp.ne.s32.totalorder %s136, %s137
      %p149 = scmp.eq.s32.totalorder %s31, 3
      %p150 = por %p148, %p149
      %p152 = scmp.ne.s32.totalorder %s137, %s151
      %p153 = scmp.eq.s32.totalorder %s31, 0
      %p154 = por %p152, %p153
      %s156 = sadd.s32 %s155, 1
      %p159 = scmp.eq.s32.totalorder %s25, 3
      %p160 = scmp.ne.s32.totalorder %s155, %s157
      %p161 = scmp.eq.s32.totalorder %s25, 0
      %p162 = por %p160, %p161
      %p163 = scmp.ne.s32.totalorder %s155, %s157
      %p164 = scmp.eq.s32.totalorder %s30, 3
      %p165 = por %p163, %p164
      %p166 = scmp.ne.s32.totalorder %s157, %s158
      %p167 = scmp.eq.s32.totalorder %s30, 0
      %p168 = por %p166, %p167
      %p169 = scmp.ne.s32.totalorder %s157, %s158
      %p170 = scmp.eq.s32.totalorder %s31, 3
      %p171 = por %p169, %p170
      %p173 = scmp.ne.s32.totalorder %s158, %s172
      %p174 = scmp.eq.s32.totalorder %s31, 0
      %p175 = por %p173, %p174
      %s177 = sadd.s32 %s176, 1
      %p180 = scmp.eq.s32.totalorder %s25, 3
      %p181 = scmp.ne.s32.totalorder %s176, %s178
      %p182 = scmp.eq.s32.totalorder %s25, 0
      %p183 = por %p181, %p182
      %p184 = scmp.ne.s32.totalorder %s176, %s178
      %p185 = scmp.eq.s32.totalorder %s30, 3
      %p186 = por %p184, %p185
      %p187 = scmp.ne.s32.totalorder %s178, %s179
      %p188 = scmp.eq.s32.totalorder %s30, 0
      %p189 = por %p187, %p188
      %p190 = scmp.ne.s32.totalorder %s178, %s179
      %p191 = scmp.eq.s32.totalorder %s31, 3
      %p192 = por %p190, %p191
      %p194 = scmp.ne.s32.totalorder %s179, %s193
      %p195 = scmp.eq.s32.totalorder %s31, 0
      %p196 = por %p194, %p195
      %s198 = sadd.s32 %s197, 1
      %p201 = scmp.eq.s32.totalorder %s25, 3
      %p202 = scmp.ne.s32.totalorder %s197, %s199
      %p203 = scmp.eq.s32.totalorder %s25, 0
      %p204 = por %p202, %p203
      %p205 = scmp.ne.s32.totalorder %s197, %s199
      %p206 = scmp.eq.s32.totalorder %s30, 3
      %p207 = por %p205, %p206
      %p208 = scmp.ne.s32.totalorder %s199, %s200
      %p209 = scmp.eq.s32.totalorder %s30, 0
      %p210 = por %p208, %p209
      %p211 = scmp.ne.s32.totalorder %s199, %s200
      %p212 = scmp.eq.s32.totalorder %s31, 3
      %p213 = por %p211, %p212
      %p215 = scmp.ne.s32.totalorder %s200, %s214
      %p216 = scmp.eq.s32.totalorder %s31, 0
      %p217 = por %p215, %p216
      %s219 = sadd.s32 %s218, 1
      %p222 = scmp.eq.s32.totalorder %s25, 3
      %p223 = scmp.ne.s32.totalorder %s218, %s220
      %p224 = scmp.eq.s32.totalorder %s25, 0
      %p225 = por %p223, %p224
      %p226 = scmp.ne.s32.totalorder %s218, %s220
      %p227 = scmp.eq.s32.totalorder %s30, 3
      %p228 = por %p226, %p227
      %p229 = scmp.ne.s32.totalorder %s220, %s221
      %p230 = scmp.eq.s32.totalorder %s30, 0
      %p231 = por %p229, %p230
      %p232 = scmp.ne.s32.totalorder %s220, %s221
      %p233 = scmp.eq.s32.totalorder %s31, 3
      %p234 = por %p232, %p233
      %p236 = scmp.ne.s32.totalorder %s221, %s235
      %p237 = scmp.eq.s32.totalorder %s31, 0
      %p238 = por %p236, %p237
      %s240 = sadd.s32 %s239, 1
      %p243 = scmp.eq.s32.totalorder %s25, 3
      %p244 = scmp.ne.s32.totalorder %s239, %s241
      %p245 = scmp.eq.s32.totalorder %s25, 0
      %p246 = por %p244, %p245
      %p247 = scmp.ne.s32.totalorder %s239, %s241
      %p248 = scmp.eq.s32.totalorder %s30, 3
      %p249 = por %p247, %p248
      %p250 = scmp.ne.s32.totalorder %s241, %s242
      %p251 = scmp.eq.s32.totalorder %s30, 0
      %p252 = por %p250, %p251
      %p253 = scmp.ne.s32.totalorder %s241, %s242
      %p254 = scmp.eq.s32.totalorder %s31, 3
      %p255 = por %p253, %p254
      %p257 = scmp.ne.s32.totalorder %s242, %s256
      %p258 = scmp.eq.s32.totalorder %s31, 0
      %p259 = por %p257, %p258
      %s261 = sadd.s32 %s260, 1
      %p264 = scmp.eq.s32.totalorder %s25, 3
      %p265 = scmp.ne.s32.totalorder %s260, %s262
      %p266 = scmp.eq.s32.totalorder %s25, 0
      %p267 = por %p265, %p266
      %p268 = scmp.ne.s32.totalorder %s260, %s262
      %p269 = scmp.eq.s32.totalorder %s30, 3
      %p270 = por %p268, %p269
      %p271 = scmp.ne.s32.totalorder %s262, %s263
      %p272 = scmp.eq.s32.totalorder %s30, 0
      %p273 = por %p271, %p272
      %p274 = scmp.ne.s32.totalorder %s262, %s263
      %p275 = scmp.eq.s32.totalorder %s31, 3
      %p276 = por %p274, %p275
      %p278 = scmp.ne.s32.totalorder %s263, %s277
      %p279 = scmp.eq.s32.totalorder %s31, 0
      %p280 = por %p278, %p279
      %s282 = sadd.s32 %s281, 1
      %p285 = scmp.eq.s32.totalorder %s25, 3
      %p286 = scmp.ne.s32.totalorder %s281, %s283
      %p287 = scmp.eq.s32.totalorder %s25, 0
      %p288 = por %p286, %p287
      %p289 = scmp.ne.s32.totalorder %s281, %s283
      %p290 = scmp.eq.s32.totalorder %s30, 3
      %p291 = por %p289, %p290
      %p292 = scmp.ne.s32.totalorder %s283, %s284
      %p293 = scmp.eq.s32.totalorder %s30, 0
      %p294 = por %p292, %p293
      %p295 = scmp.ne.s32.totalorder %s283, %s284
      %p296 = scmp.eq.s32.totalorder %s31, 3
      %p297 = por %p295, %p296
      %p299 = scmp.ne.s32.totalorder %s284, %s298
      %p300 = scmp.eq.s32.totalorder %s31, 0
      %p301 = por %p299, %p300
      %s302 = ssub.s32 %s32, %s44
      %s303 = ssub.s32 %s33, %s40
      %s304 = sor.u32 %s302, %s303
      %p305 = scmp.eq.s32.totalorder %s304, 0
      %s307 = sadd.s32 %s306, 1
      %s308 = scalar_select %p305, %s306, %s307
      %p311 = pneg %p305
      %p312 = scmp.eq.s32.totalorder %s25, 3
      %p313 = por %p311, %p312
      %p314 = scmp.ne.s32.totalorder %s306, %s309
      %p315 = scmp.eq.s32.totalorder %s25, 0
      %p316 = por %p314, %p315
      %p317 = scmp.ne.s32.totalorder %s306, %s309
      %p318 = scmp.eq.s32.totalorder %s30, 3
      %p319 = por %p317, %p318
      %p320 = scmp.ne.s32.totalorder %s309, %s310
      %p321 = scmp.eq.s32.totalorder %s30, 0
      %p322 = por %p320, %p321
      %p323 = scmp.ne.s32.totalorder %s309, %s310
      %p324 = scmp.eq.s32.totalorder %s31, 3
      %p325 = por %p323, %p324
      %p327 = scmp.ne.s32.totalorder %s310, %s326
      %p328 = scmp.eq.s32.totalorder %s31, 0
      %p329 = por %p327, %p328
      %p330 = scmp.le.s32.totalorder 1, %s25
      %p331 = scmp.lt.s32.totalorder %s25, 5
      %p332 = pnand %p330, %p331
      %p333 = pneg %p332
      // Predicated region
      $region9: #{tpu_custom_call.1} parent=5 // pred_check
        _
      $region10: #{tpu_custom_call.1} parent=5 // pred_check_branch
        %335 = sbr.rel (%p332) target = $region12
      $region11: #{tpu_custom_call.1} parent=5 // pred_region
        %s336 = ssub.s32 %s25, 1
        // Predicated region
        $region13: #{tpu_custom_call.1} parent=11 // pred_check
          %p337 = pneg %p84
        $region14: #{tpu_custom_call.1} parent=11 // pred_check_branch
          %339 = sbr.rel (%p337) target = $region16
        $region15: #{tpu_custom_call.1} parent=11 // pred_region
          _
        $region16: #{tpu_custom_call.1} parent=11 // pred_fallthru
          _
        // Predicated region
        $region17: #{tpu_custom_call.1} parent=11 // pred_check
          %p340 = pneg %p105
        $region18: #{tpu_custom_call.1} parent=11 // pred_check_branch
          %342 = sbr.rel (%p340) target = $region20
        $region19: #{tpu_custom_call.1} parent=11 // pred_region
          _
        $region20: #{tpu_custom_call.1} parent=11 // pred_fallthru
          _
        // Predicated region
        $region21: #{tpu_custom_call.1} parent=11 // pred_check
          %p343 = pneg %p126
        $region22: #{tpu_custom_call.1} parent=11 // pred_check_branch
          %345 = sbr.rel (%p343) target = $region24
        $region23: #{tpu_custom_call.1} parent=11 // pred_region
          _
        $region24: #{tpu_custom_call.1} parent=11 // pred_fallthru
          _
        // Predicated region
        $region25: #{tpu_custom_call.1} parent=11 // pred_check
          %p346 = pneg %p147
        $region26: #{tpu_custom_call.1} parent=11 // pred_check_branch
          %348 = sbr.rel (%p346) target = $region28
        $region27: #{tpu_custom_call.1} parent=11 // pred_region
          %s350 = ssub.s32 256, 256
          %351 = vsyncadd [#allocation5], %s350
          %s352 = sshll.u32 [#allocation4], 4
          %s353 = int_to_ptr.vmem [resolvable:$true] %s352
          %358 = dma.hbm_to_vmem [thread:$0]  %s4, 256, %s353, [#allocation5], 64, 64, 4
        $region28: #{tpu_custom_call.1} parent=11 // pred_fallthru
          _
        // Predicated region
        $region29: #{tpu_custom_call.1} parent=11 // pred_check
          %p359 = pneg %p168
        $region30: #{tpu_custom_call.1} parent=11 // pred_check_branch
          %361 = sbr.rel (%p359) target = $region32
        $region31: #{tpu_custom_call.1} parent=11 // pred_region
          %s363 = ssub.s32 256, 256
          %364 = vsyncadd [#allocation8], %s363
          %s365 = sshll.u32 [#allocation7], 4
          %s366 = int_to_ptr.vmem [resolvable:$true] %s365
          %371 = dma.hbm_to_vmem [thread:$0]  %s5, 256, %s366, [#allocation8], 64, 64, 4
        $region32: #{tpu_custom_call.1} parent=11 // pred_fallthru
          _
        // Predicated region
        $region33: #{tpu_custom_call.1} parent=11 // pred_check
          %p372 = pneg %p189
        $region34: #{tpu_custom_call.1} parent=11 // pred_check_branch
          %374 = sbr.rel (%p372) target = $region36
        $region35: #{tpu_custom_call.1} parent=11 // pred_region
          %s376 = ssub.s32 16, 16
          %377 = vsyncadd [#allocation8], %s376
          %s379 = sshll.u32 [#allocation9], 4
          %s380 = int_to_ptr.vmem [resolvable:$true] %s379
          %382 = dma.hbm_to_vmem [thread:$0]  %s6, 16, %s380, [#allocation8]
        $region36: #{tpu_custom_call.1} parent=11 // pred_fallthru
          _
        // Predicated region
        $region37: #{tpu_custom_call.1} parent=11 // pred_check
          %p383 = pneg %p210
        $region38: #{tpu_custom_call.1} parent=11 // pred_check_branch
          %385 = sbr.rel (%p383) target = $region40
        $region39: #{tpu_custom_call.1} parent=11 // pred_region
          %s387 = ssub.s32 16, 16
          %388 = vsyncadd [#allocation11], %s387
          %s390 = sshll.u32 [#allocation10], 4
          %s391 = int_to_ptr.vmem [resolvable:$true] %s390
          %393 = dma.hbm_to_vmem [thread:$0]  %s7, 16, %s391, [#allocation11]
        $region40: #{tpu_custom_call.1} parent=11 // pred_fallthru
          _
        // Predicated region
        $region41: #{tpu_custom_call.1} parent=11 // pred_check
          %p394 = pneg %p231
        $region42: #{tpu_custom_call.1} parent=11 // pred_check_branch
          %396 = sbr.rel (%p394) target = $region44
        $region43: #{tpu_custom_call.1} parent=11 // pred_region
          %s398 = ssub.s32 256, 256
          %399 = vsyncadd [#allocation11], %s398
          %s400 = sshll.u32 [#allocation12], 4
          %s401 = int_to_ptr.vmem [resolvable:$true] %s400
          %406 = dma.hbm_to_vmem [thread:$0]  %s8, 256, %s401, [#allocation11], 64, 64, 4
        $region44: #{tpu_custom_call.1} parent=11 // pred_fallthru
          _
        // Predicated region
        $region45: #{tpu_custom_call.1} parent=11 // pred_check
          %p407 = pneg %p252
        $region46: #{tpu_custom_call.1} parent=11 // pred_check_branch
          %409 = sbr.rel (%p407) target = $region48
        $region47: #{tpu_custom_call.1} parent=11 // pred_region
          %s411 = ssub.s32 16, 16
          %412 = vsyncadd [#allocation14], %s411
          %s414 = sshll.u32 [#allocation13], 4
          %s415 = int_to_ptr.vmem [resolvable:$true] %s414
          %417 = dma.hbm_to_vmem [thread:$0]  %s9, 16, %s415, [#allocation14]
        $region48: #{tpu_custom_call.1} parent=11 // pred_fallthru
          _
        // Predicated region
        $region49: #{tpu_custom_call.1} parent=11 // pred_check
          %p418 = pneg %p273
        $region50: #{tpu_custom_call.1} parent=11 // pred_check_branch
          %420 = sbr.rel (%p418) target = $region52
        $region51: #{tpu_custom_call.1} parent=11 // pred_region
          _
        $region52: #{tpu_custom_call.1} parent=11 // pred_fallthru
          _
        // Predicated region
        $region53: #{tpu_custom_call.1} parent=11 // pred_check
          %p421 = pneg %p294
        $region54: #{tpu_custom_call.1} parent=11 // pred_check_branch
          %423 = sbr.rel (%p421) target = $region56
        $region55: #{tpu_custom_call.1} parent=11 // pred_region
          _
        $region56: #{tpu_custom_call.1} parent=11 // pred_fallthru
          _
      $region12: #{tpu_custom_call.1} parent=5 // pred_fallthru
        _
      %p424 = scmp.lt.s32.totalorder %s25, 4
      // Predicated region
      $region57: #{tpu_custom_call.1} parent=5 // pred_check
        %p425 = pneg %p424
      $region58: #{tpu_custom_call.1} parent=5 // pred_check_branch
        %427 = sbr.rel (%p425) target = $region60
      $region59: #{tpu_custom_call.1} parent=5 // pred_region
        // Predicated region
        $region61: #{tpu_custom_call.1} parent=59 // pred_check
          %p428 = pneg %p57
        $region62: #{tpu_custom_call.1} parent=59 // pred_check_branch
          %430 = sbr.rel (%p428) target = $region64
        $region63: #{tpu_custom_call.1} parent=59 // pred_region
          %p431 = scmp.lt.s32.totalorder %s32, 1
          %s432 = scalar_select %p431, %s32, 1
          %s433 = smul.addr %s432, 2
          %s434 = smul.addr %s433, 8
          %s435 = scalar_lea.vmem %s0, %s434
        $region64: #{tpu_custom_call.1} parent=59 // pred_fallthru
          _
      $region60: #{tpu_custom_call.1} parent=5 // pred_fallthru
        _
      %p436 = scmp.le.s32.totalorder 1, %s25
      %p437 = scmp.lt.s32.totalorder %s25, 5
      %p438 = pnand %p436, %p437
      %p439 = pneg %p438
      // Predicated region
      $region65: #{tpu_custom_call.1} parent=5 // pred_check
        _
      $region66: #{tpu_custom_call.1} parent=5 // pred_check_branch
        %441 = sbr.rel (%p438) target = $region68
      $region67: #{tpu_custom_call.1} parent=5 // pred_region
        %s442 = ssub.s32 %s25, 1
        // Predicated region
        $region69: #{tpu_custom_call.1} parent=67 // pred_check
          %p443 = pneg %p147
        $region70: #{tpu_custom_call.1} parent=67 // pred_check_branch
          %445 = sbr.rel (%p443) target = $region72
        $region71: #{tpu_custom_call.1} parent=67 // pred_region
          %446 = dma.done [#allocation5], 256
        $region72: #{tpu_custom_call.1} parent=67 // pred_fallthru
          _
        // Predicated region
        $region73: #{tpu_custom_call.1} parent=67 // pred_check
          %p447 = pneg %p168
        $region74: #{tpu_custom_call.1} parent=67 // pred_check_branch
          %449 = sbr.rel (%p447) target = $region76
        $region75: #{tpu_custom_call.1} parent=67 // pred_region
          %450 = dma.done [#allocation8], 256
        $region76: #{tpu_custom_call.1} parent=67 // pred_fallthru
          _
        // Predicated region
        $region77: #{tpu_custom_call.1} parent=67 // pred_check
          %p451 = pneg %p189
        $region78: #{tpu_custom_call.1} parent=67 // pred_check_branch
          %453 = sbr.rel (%p451) target = $region80
        $region79: #{tpu_custom_call.1} parent=67 // pred_region
          %454 = dma.done [#allocation8], 16
        $region80: #{tpu_custom_call.1} parent=67 // pred_fallthru
          _
        // Predicated region
        $region81: #{tpu_custom_call.1} parent=67 // pred_check
          %p455 = pneg %p210
        $region82: #{tpu_custom_call.1} parent=67 // pred_check_branch
          %457 = sbr.rel (%p455) target = $region84
        $region83: #{tpu_custom_call.1} parent=67 // pred_region
          %458 = dma.done [#allocation11], 16
        $region84: #{tpu_custom_call.1} parent=67 // pred_fallthru
          _
        // Predicated region
        $region85: #{tpu_custom_call.1} parent=67 // pred_check
          %p459 = pneg %p231
        $region86: #{tpu_custom_call.1} parent=67 // pred_check_branch
          %461 = sbr.rel (%p459) target = $region88
        $region87: #{tpu_custom_call.1} parent=67 // pred_region
          %462 = dma.done [#allocation11], 256
        $region88: #{tpu_custom_call.1} parent=67 // pred_fallthru
          _
        // Predicated region
        $region89: #{tpu_custom_call.1} parent=67 // pred_check
          %p463 = pneg %p252
        $region90: #{tpu_custom_call.1} parent=67 // pred_check_branch
          %465 = sbr.rel (%p463) target = $region92
        $region91: #{tpu_custom_call.1} parent=67 // pred_region
          %466 = dma.done [#allocation14], 16
        $region92: #{tpu_custom_call.1} parent=67 // pred_fallthru
          _
        %p467 = scmp.lt.s32.totalorder %s34, 1
        %s468 = scalar_select %p467, %s34, 1
        %s469 = smul.addr %s468, 2
        %s470 = smul.addr %s469, 8
        %s471 = scalar_lea.vmem %s0, %s470
        %p472 = pneg %p63
        %p473 = pneg %p60
        %p474 = pneg %p84
        %p475 = pneg %p81
        %p476 = pneg %p105
        %p477 = pneg %p102
        %p478 = pneg %p126
        %p479 = pneg %p123
        %p480 = pneg %p147
        %p481 = pneg %p144
        %p482 = pneg %p168
        %p483 = pneg %p165
        %p484 = pneg %p189
        %p485 = pneg %p186
        %p486 = pneg %p210
        %p487 = pneg %p207
        %p488 = pneg %p231
        %p489 = pneg %p228
        %p490 = pneg %p252
        %p491 = pneg %p249
        %p492 = pneg %p273
        %p493 = pneg %p270
        %p494 = pneg %p294
        %p495 = pneg %p291
        %p496 = pneg %p322
        %p497 = pneg %p319
        %s498 = sand.u32 %s309, 1
        %s499 = scalar_lea.sflag [#allocation6], %s498
        %s500 = sand.u32 %s309, 1
        %s501 = smul.addr %s500, 8
        %s502 = scalar_lea.vmem [#allocation15], %s501
        %p503 = scmp.lt.s32.totalorder %s34, 1
        %s504 = scalar_select %p503, %s34, 1
        %s505 = smul.addr %s504, 2
        %s506 = smul.addr %s505, 8
        %s507 = scalar_lea.vmem %s0, %s506
        %v509 = vld [vmem:[%s1] sm:$0x1]
        %v510 = vld [vmem:[%s2] sm:$0x1]
        %p511 = scmp.eq.s32.totalorder %s35, 0
        // Predicated region
        $region93: #{tpu_custom_call.1} parent=67 // pred_check
          %p512 = pneg %p511
        $region94: #{tpu_custom_call.1} parent=67 // pred_check_branch
          %514 = sbr.rel (%p512) target = $region96
        $region95: #{tpu_custom_call.1} parent=67 // pred_region
          %v515 = vld [vmem:[%s507] sm:$0xff]
          %v516 = vld [vmem:[%s507 + $0x8] sm:$0xff]
          %vm517 = vcmask 261120
          %v518 = vsel %vm517, %v515, 0.0
          %519 = vadd.xlane.f32.xlu0 %v518
          %v520 = vpop.xlane.xlu0 %519
          %v521 = vsel %vm517, %v516, 0.0
          %522 = vadd.xlane.f32.xlu0 %v521
          %v523 = vpop.xlane.xlu0 %522
          %v524 = vrcp.pop 32.0
          %v525 = vmul.f32 %v520, %v524
          %v526 = vmul.f32 %v523, %v524
          %v527 = vsub.f32 %v515, %v525
          %v528 = vsub.f32 %v516, %v526
          %v529 = vmul.f32 %v527, %v527
          %v530 = vmul.f32 %v528, %v528
          %v531 = vsel %vm517, %v529, 0.0
          %532 = vadd.xlane.f32.xlu0 %v531
          %v533 = vpop.xlane.xlu0 %532
          %v534 = vsel %vm517, %v530, 0.0
          %535 = vadd.xlane.f32.xlu0 %v534
          %v536 = vpop.xlane.xlu0 %535
          %v537 = vmul.f32 %v533, %v524
          %v538 = vmul.f32 %v536, %v524
          %v539 = vadd.f32 %v537, 1e-06
          %v540 = vadd.f32 %v538, 1e-06
          %v541 = vrsqrt.pop %v539
          %v542 = vrsqrt.pop %v540
          %v543 = vmul.f32 %v527, %v541
          %v544 = vmul.f32 %v528, %v542
          %v546 = vlaneseq
          %v547 = vshrl.u32 %v546, 7
          %v548 = vsub.s32 0, %v547
          %v549 = vrot.slane %v509, %v548
          %v551 = vmul.f32 %v543, %v549
          %v552 = vmul.f32 %v544, %v549
          %v554 = vlaneseq
          %v555 = vshrl.u32 %v554, 7
          %v556 = vsub.s32 0, %v555
          %v557 = vrot.slane %v510, %v556
          %v559 = vadd.f32 %v551, %v557
          %v560 = vadd.f32 %v552, %v557
          %v561 = vpack.c.bf16 %v560, %v559
          %v562 = vld [vmem:[#allocation4] sm:$0xf]
          %v563 = vld [vmem:[#allocation4 + $0x4] sm:$0xf]
          %v564 = vld [vmem:[#allocation4 + $0x8] sm:$0xf]
          %v565 = vld [vmem:[#allocation4 + $0xc] sm:$0xf]
          %v570 = vunpack.c.l.b16 %v562
          %v571 = vunpack.c.l.b16 %v563
          %v572 = vunpack.c.l.b16 %v564
          %v573 = vunpack.c.l.b16 %v565
          %v574 = vpack.c.b16 %v571, %v570
          %v575 = vpack.c.b16 %v573, %v572
          %v579 = vsel %vm517, %v561, 0
          %581 = vmatprep.subr.bf16.mxu0 0
          %582 = vmatpush1.bf16.msra.mxu0 0
          %583 = vmatprep.subr.bf16.mxu0 0
          %584 = vmatpush1.bf16.msra.mxu0 0
          %585 = vmatprep.subr.bf16.mxu0 0
          %586 = vmatpush1.bf16.msra.mxu0 0
          %587 = vmatprep.subr.bf16.mxu0 0
          %588 = vmatpush1.bf16.msra.mxu0 0
          %589 = vmatprep.subr.bf16.mxu0 0
          %590 = vmatpush1.bf16.msra.mxu0 0
          %591 = vmatprep.subr.bf16.mxu0 0
          %592 = vmatpush1.bf16.msra.mxu0 0
          %593 = vmatprep.subr.bf16.mxu0 0
          %594 = vmatpush1.bf16.msra.mxu0 %v575
          %595 = vmatprep.subr.bf16.mxu0 0
          %596 = vmatpush1.bf16.msra.mxu0 %v574
          %597 = vmatprep.subr.bf16.mxu0 0
          %598 = vmatpush2.bf16.msra.mxu0 0
          %599 = vmatprep.subr.bf16.mxu0 0
          %600 = vmatpush2.bf16.msra.mxu0 0
          %601 = vmatprep.subr.bf16.mxu0 0
          %602 = vmatpush2.bf16.msra.mxu0 0
          %603 = vmatprep.subr.bf16.mxu0 0
          %604 = vmatpush2.bf16.msra.mxu0 0
          %605 = vmatprep.subr.bf16.mxu0 0
          %606 = vmatpush2.bf16.msra.mxu0 0
          %607 = vmatprep.subr.bf16.mxu0 0
          %608 = vmatpush2.bf16.msra.mxu0 0
          %609 = vmatprep.subr.bf16.mxu0 0
          %610 = vmatpush2.bf16.msra.mxu0 0
          %611 = vmatprep.subr.bf16.mxu0 0
          %612 = vmatpush2.bf16.msra.mxu0 0
          %613 = vmatprep.mubr.bf16.mxu0 0
          %614 = vmatmul.mubr.bf16.gmra.mxu0 %v579
          %v615 = vpop.f32.mrf.mxu0
          %v616 = vadd.f32 0.0, %v615
          %v617 = vpop.f32.mrf.mxu0
          %v618 = vpop.f32.mrf.mxu0
          %v619 = vadd.f32 0.0, %v618
          %v620 = vpop.f32.mrf.mxu0
          %621 = vdwg.mxu0
          %v622 = vpack.c.bf16 %v619, %v616
          %624 = vrot.lane.b32.xlu0 %v622, 120
          %v625 = vpop.permute.xlu0 %624
          %626 = vrot.lane.b32.xlu0 %v622, 112
          %v627 = vpop.permute.xlu0 %626
          %628 = vrot.lane.b32.xlu0 %v622, 104
          %v629 = vpop.permute.xlu0 %628
          %v632 = vpack.i.b16 %v625, %v622
          %v634 = vshrl.u32 %v622, 16
          %v635 = vshrl.u32 %v625, 16
          %v636 = vpack.i.b16 %v635, %v634
          %v640 = vpack.i.b16 %v629, %v627
          %v642 = vshrl.u32 %v627, 16
          %v643 = vshrl.u32 %v629, 16
          %v644 = vpack.i.b16 %v643, %v642
          %v647 = vpack.i.b16 0, 0
          %v649 = vshrl.u32 0, 16
          %v650 = vpack.i.b16 %v649, %v649
          %v652 = vcombine.high %v632, %v647
          %v654 = vunpack.c.l.s4 1983009808
          %v655 = vunpack.c.0.s8 %v654
          %v656 = vlaneseq
          %v657 = vshrl.u32 %v656, 7
          %v658 = vsub.s32 %v655, %v657
          %v659 = vrot.slane %v632, %v658
          %v661 = vunpack.c.l.s4 1983009808
          %v662 = vunpack.c.0.s8 %v661
          %v663 = vlaneseq
          %v664 = vshrl.u32 %v663, 7
          %v665 = vsub.s32 %v662, %v664
          %v666 = vrot.slane %v652, %v665
          %v667 = vcombine.high %v640, %v647
          %v669 = vunpack.c.l.s4 1983009808
          %v670 = vunpack.c.0.s8 %v669
          %v671 = vlaneseq
          %v672 = vshrl.u32 %v671, 7
          %v673 = vsub.s32 %v670, %v672
          %v674 = vrot.slane %v640, %v673
          %v676 = vunpack.c.l.s4 1983009808
          %v677 = vunpack.c.0.s8 %v676
          %v678 = vlaneseq
          %v679 = vshrl.u32 %v678, 7
          %v680 = vsub.s32 %v677, %v679
          %v681 = vrot.slane %v667, %v680
          %v682 = vcombine.low %v659, %v674
          %v683 = vcombine.high %v659, %v674
          %v685 = vunpack.c.l.s4 1934713408
          %v686 = vunpack.c.0.s8 %v685
          %v687 = vlaneseq
          %v688 = vshrl.u32 %v687, 7
          %v689 = vsub.s32 %v686, %v688
          %v690 = vrot.slane %v682, %v689
          %v692 = vunpack.c.l.s4 1934713408
          %v693 = vunpack.c.0.s8 %v692
          %v694 = vlaneseq
          %v695 = vshrl.u32 %v694, 7
          %v696 = vsub.s32 %v693, %v695
          %v697 = vrot.slane %v683, %v696
          %v698 = vcombine.low %v666, %v681
          %v699 = vcombine.high %v666, %v681
          %v701 = vunpack.c.l.s4 1934713408
          %v702 = vunpack.c.0.s8 %v701
          %v703 = vlaneseq
          %v704 = vshrl.u32 %v703, 7
          %v705 = vsub.s32 %v702, %v704
          %v706 = vrot.slane %v698, %v705
          %v708 = vunpack.c.l.s4 1934713408
          %v709 = vunpack.c.0.s8 %v708
          %v710 = vlaneseq
          %v711 = vshrl.u32 %v710, 7
          %v712 = vsub.s32 %v709, %v711
          %v713 = vrot.slane %v699, %v712
          %v714 = vcombine.high %v690, 0
          %v715 = vcombine.high %v697, 0
          %v716 = vcombine.high %v706, 0
          %v717 = vcombine.high %v713, 0
          %v718 = vcombine.high %v636, %v650
          %v720 = vunpack.c.l.s4 1983009808
          %v721 = vunpack.c.0.s8 %v720
          %v722 = vlaneseq
          %v723 = vshrl.u32 %v722, 7
          %v724 = vsub.s32 %v721, %v723
          %v725 = vrot.slane %v636, %v724
          %v727 = vunpack.c.l.s4 1983009808
          %v728 = vunpack.c.0.s8 %v727
          %v729 = vlaneseq
          %v730 = vshrl.u32 %v729, 7
          %v731 = vsub.s32 %v728, %v730
          %v732 = vrot.slane %v718, %v731
          %v733 = vcombine.high %v644, %v650
          %v735 = vunpack.c.l.s4 1983009808
          %v736 = vunpack.c.0.s8 %v735
          %v737 = vlaneseq
          %v738 = vshrl.u32 %v737, 7
          %v739 = vsub.s32 %v736, %v738
          %v740 = vrot.slane %v644, %v739
          %v742 = vunpack.c.l.s4 1983009808
          %v743 = vunpack.c.0.s8 %v742
          %v744 = vlaneseq
          %v745 = vshrl.u32 %v744, 7
          %v746 = vsub.s32 %v743, %v745
          %v747 = vrot.slane %v733, %v746
          %v748 = vcombine.low %v725, %v740
          %v749 = vcombine.high %v725, %v740
          %v751 = vunpack.c.l.s4 1934713408
          %v752 = vunpack.c.0.s8 %v751
          %v753 = vlaneseq
          %v754 = vshrl.u32 %v753, 7
          %v755 = vsub.s32 %v752, %v754
          %v756 = vrot.slane %v748, %v755
          %v758 = vunpack.c.l.s4 1934713408
          %v759 = vunpack.c.0.s8 %v758
          %v760 = vlaneseq
          %v761 = vshrl.u32 %v760, 7
          %v762 = vsub.s32 %v759, %v761
          %v763 = vrot.slane %v749, %v762
          %v764 = vcombine.low %v732, %v747
          %v765 = vcombine.high %v732, %v747
          %v767 = vunpack.c.l.s4 1934713408
          %v768 = vunpack.c.0.s8 %v767
          %v769 = vlaneseq
          %v770 = vshrl.u32 %v769, 7
          %v771 = vsub.s32 %v768, %v770
          %v772 = vrot.slane %v764, %v771
          %v774 = vunpack.c.l.s4 1934713408
          %v775 = vunpack.c.0.s8 %v774
          %v776 = vlaneseq
          %v777 = vshrl.u32 %v776, 7
          %v778 = vsub.s32 %v775, %v777
          %v779 = vrot.slane %v765, %v778
          %v780 = vcombine.high %v756, 0
          %v781 = vcombine.high %v763, 0
          %v782 = vcombine.high %v772, 0
          %v783 = vcombine.high %v779, 0
          %v784 = vcombine.low %v690, %v697
          %v786 = vunpack.c.l.s4 1983009808
          %v787 = vunpack.c.0.s8 %v786
          %v788 = vlaneseq
          %v789 = vshrl.u32 %v788, 7
          %v790 = vsub.s32 %v787, %v789
          %v791 = vrot.slane %v784, %v790
          %v792 = vcombine.low %v714, %v715
          %v794 = vunpack.c.l.s4 1983009808
          %v795 = vunpack.c.0.s8 %v794
          %v796 = vlaneseq
          %v797 = vshrl.u32 %v796, 7
          %v798 = vsub.s32 %v795, %v797
          %v799 = vrot.slane %v792, %v798
          %v800 = vcombine.low %v706, %v713
          %v802 = vunpack.c.l.s4 1983009808
          %v803 = vunpack.c.0.s8 %v802
          %v804 = vlaneseq
          %v805 = vshrl.u32 %v804, 7
          %v806 = vsub.s32 %v803, %v805
          %v807 = vrot.slane %v800, %v806
          %v808 = vcombine.low %v716, %v717
          %v810 = vunpack.c.l.s4 1983009808
          %v811 = vunpack.c.0.s8 %v810
          %v812 = vlaneseq
          %v813 = vshrl.u32 %v812, 7
          %v814 = vsub.s32 %v811, %v813
          %v815 = vrot.slane %v808, %v814
          %v816 = vcombine.low %v791, %v799
          %v818 = vunpack.c.l.s4 1934713408
          %v819 = vunpack.c.0.s8 %v818
          %v820 = vlaneseq
          %v821 = vshrl.u32 %v820, 7
          %v822 = vsub.s32 %v819, %v821
          %v823 = vrot.slane %v816, %v822
          %v824 = vcombine.low %v807, %v815
          %v826 = vunpack.c.l.s4 1934713408
          %v827 = vunpack.c.0.s8 %v826
          %v828 = vlaneseq
          %v829 = vshrl.u32 %v828, 7
          %v830 = vsub.s32 %v827, %v829
          %v831 = vrot.slane %v824, %v830
          %v832 = vcombine.low %v823, %v831
          %v833 = vcombine.high %v823, %v831
          %v834 = vcombine.low %v756, %v763
          %v836 = vunpack.c.l.s4 1983009808
          %v837 = vunpack.c.0.s8 %v836
          %v838 = vlaneseq
          %v839 = vshrl.u32 %v838, 7
          %v840 = vsub.s32 %v837, %v839
          %v841 = vrot.slane %v834, %v840
          %v842 = vcombine.low %v780, %v781
          %v844 = vunpack.c.l.s4 1983009808
          %v845 = vunpack.c.0.s8 %v844
          %v846 = vlaneseq
          %v847 = vshrl.u32 %v846, 7
          %v848 = vsub.s32 %v845, %v847
          %v849 = vrot.slane %v842, %v848
          %v850 = vcombine.low %v772, %v779
          %v852 = vunpack.c.l.s4 1983009808
          %v853 = vunpack.c.0.s8 %v852
          %v854 = vlaneseq
          %v855 = vshrl.u32 %v854, 7
          %v856 = vsub.s32 %v853, %v855
          %v857 = vrot.slane %v850, %v856
          %v858 = vcombine.low %v782, %v783
          %v860 = vunpack.c.l.s4 1983009808
          %v861 = vunpack.c.0.s8 %v860
          %v862 = vlaneseq
          %v863 = vshrl.u32 %v862, 7
          %v864 = vsub.s32 %v861, %v863
          %v865 = vrot.slane %v858, %v864
          %v866 = vcombine.low %v841, %v849
          %v868 = vunpack.c.l.s4 1934713408
          %v869 = vunpack.c.0.s8 %v868
          %v870 = vlaneseq
          %v871 = vshrl.u32 %v870, 7
          %v872 = vsub.s32 %v869, %v871
          %v873 = vrot.slane %v866, %v872
          %v874 = vcombine.low %v857, %v865
          %v876 = vunpack.c.l.s4 1934713408
          %v877 = vunpack.c.0.s8 %v876
          %v878 = vlaneseq
          %v879 = vshrl.u32 %v878, 7
          %v880 = vsub.s32 %v877, %v879
          %v881 = vrot.slane %v874, %v880
          %v882 = vcombine.low %v873, %v881
          %v883 = vcombine.high %v873, %v881
          %v886 = vpack.i.b16 %v882, %v832
          %v887 = vshrl.u32 %v832, 16
          %v888 = vshrl.u32 %v882, 16
          %v889 = vpack.i.b16 %v888, %v887
          %v892 = vpack.i.b16 %v883, %v833
          %v893 = vshrl.u32 %v833, 16
          %v894 = vshrl.u32 %v883, 16
          %v895 = vpack.i.b16 %v894, %v893
          %v896 = vunpack.c.l.b16 %v886
          %v897 = vunpack.c.h.b16 %v886
          %v898 = vunpack.c.l.b16 %v889
          %v899 = vunpack.c.h.b16 %v889
          %v900 = vunpack.c.l.b16 %v892
          %v901 = vunpack.c.h.b16 %v892
          %v902 = vunpack.c.l.b16 %v895
          %v903 = vunpack.c.h.b16 %v895
          %v904 = vpack.c.b16 %v896, %v896
          %v905 = vpack.c.b16 %v897, %v897
          %v906 = vpack.c.b16 %v898, %v898
          %v907 = vpack.c.b16 %v899, %v899
          %v908 = vpack.c.b16 %v900, %v900
          %v909 = vpack.c.b16 %v901, %v901
          %v910 = vpack.c.b16 %v902, %v902
          %v911 = vpack.c.b16 %v903, %v903
          %vm920 = vcmask 60416
          %921 = vst.msk [vmem:[#allocation2] sm:$0xf] %vm920, %v904
          %922 = vst.msk [vmem:[#allocation2 + $0x4] sm:$0xf] %vm920, %v905
          %923 = vst.msk [vmem:[#allocation2 + $0x8] sm:$0xf] %vm920, %v906
          %924 = vst.msk [vmem:[#allocation2 + $0xc] sm:$0xf] %vm920, %v907
          %925 = vst.msk [vmem:[#allocation2 + $0x10] sm:$0xf] %vm920, %v908
          %926 = vst.msk [vmem:[#allocation2 + $0x14] sm:$0xf] %vm920, %v909
          %927 = vst.msk [vmem:[#allocation2 + $0x18] sm:$0xf] %vm920, %v910
          %928 = vst.msk [vmem:[#allocation2 + $0x1c] sm:$0xf] %vm920, %v911
          %929 = vrot.lane.b32.xlu0 %v622, 96
          %v930 = vpop.permute.xlu0 %929
          %931 = vrot.lane.b32.xlu0 %v625, 96
          %v932 = vpop.permute.xlu0 %931
          %933 = vrot.lane.b32.xlu0 %v627, 96
          %v934 = vpop.permute.xlu0 %933
          %935 = vrot.lane.b32.xlu0 %v629, 96
          %v936 = vpop.permute.xlu0 %935
          %v939 = vpack.i.b16 %v932, %v930
          %v941 = vshrl.u32 %v930, 16
          %v942 = vshrl.u32 %v932, 16
          %v943 = vpack.i.b16 %v942, %v941
          %v947 = vpack.i.b16 %v936, %v934
          %v949 = vshrl.u32 %v934, 16
          %v950 = vshrl.u32 %v936, 16
          %v951 = vpack.i.b16 %v950, %v949
          %v953 = vcombine.high %v939, %v647
          %v955 = vunpack.c.l.s4 1983009808
          %v956 = vunpack.c.0.s8 %v955
          %v957 = vlaneseq
          %v958 = vshrl.u32 %v957, 7
          %v959 = vsub.s32 %v956, %v958
          %v960 = vrot.slane %v939, %v959
          %v962 = vunpack.c.l.s4 1983009808
          %v963 = vunpack.c.0.s8 %v962
          %v964 = vlaneseq
          %v965 = vshrl.u32 %v964, 7
          %v966 = vsub.s32 %v963, %v965
          %v967 = vrot.slane %v953, %v966
          %v968 = vcombine.high %v947, %v647
          %v970 = vunpack.c.l.s4 1983009808
          %v971 = vunpack.c.0.s8 %v970
          %v972 = vlaneseq
          %v973 = vshrl.u32 %v972, 7
          %v974 = vsub.s32 %v971, %v973
          %v975 = vrot.slane %v947, %v974
          %v977 = vunpack.c.l.s4 1983009808
          %v978 = vunpack.c.0.s8 %v977
          %v979 = vlaneseq
          %v980 = vshrl.u32 %v979, 7
          %v981 = vsub.s32 %v978, %v980
          %v982 = vrot.slane %v968, %v981
          %v983 = vcombine.low %v960, %v975
          %v984 = vcombine.high %v960, %v975
          %v986 = vunpack.c.l.s4 1934713408
          %v987 = vunpack.c.0.s8 %v986
          %v988 = vlaneseq
          %v989 = vshrl.u32 %v988, 7
          %v990 = vsub.s32 %v987, %v989
          %v991 = vrot.slane %v983, %v990
          %v993 = vunpack.c.l.s4 1934713408
          %v994 = vunpack.c.0.s8 %v993
          %v995 = vlaneseq
          %v996 = vshrl.u32 %v995, 7
          %v997 = vsub.s32 %v994, %v996
          %v998 = vrot.slane %v984, %v997
          %v999 = vcombine.low %v967, %v982
          %v1000 = vcombine.high %v967, %v982
          %v1002 = vunpack.c.l.s4 1934713408
          %v1003 = vunpack.c.0.s8 %v1002
          %v1004 = vlaneseq
          %v1005 = vshrl.u32 %v1004, 7
          %v1006 = vsub.s32 %v1003, %v1005
          %v1007 = vrot.slane %v999, %v1006
          %v1009 = vunpack.c.l.s4 1934713408
          %v1010 = vunpack.c.0.s8 %v1009
          %v1011 = vlaneseq
          %v1012 = vshrl.u32 %v1011, 7
          %v1013 = vsub.s32 %v1010, %v1012
          %v1014 = vrot.slane %v1000, %v1013
          %v1015 = vcombine.high %v991, 0
          %v1016 = vcombine.high %v998, 0
          %v1017 = vcombine.high %v1007, 0
          %v1018 = vcombine.high %v1014, 0
          %v1019 = vcombine.high %v943, %v650
          %v1021 = vunpack.c.l.s4 1983009808
          %v1022 = vunpack.c.0.s8 %v1021
          %v1023 = vlaneseq
          %v1024 = vshrl.u32 %v1023, 7
          %v1025 = vsub.s32 %v1022, %v1024
          %v1026 = vrot.slane %v943, %v1025
          %v1028 = vunpack.c.l.s4 1983009808
          %v1029 = vunpack.c.0.s8 %v1028
          %v1030 = vlaneseq
          %v1031 = vshrl.u32 %v1030, 7
          %v1032 = vsub.s32 %v1029, %v1031
          %v1033 = vrot.slane %v1019, %v1032
          %v1034 = vcombine.high %v951, %v650
          %v1036 = vunpack.c.l.s4 1983009808
          %v1037 = vunpack.c.0.s8 %v1036
          %v1038 = vlaneseq
          %v1039 = vshrl.u32 %v1038, 7
          %v1040 = vsub.s32 %v1037, %v1039
          %v1041 = vrot.slane %v951, %v1040
          %v1043 = vunpack.c.l.s4 1983009808
          %v1044 = vunpack.c.0.s8 %v1043
          %v1045 = vlaneseq
          %v1046 = vshrl.u32 %v1045, 7
          %v1047 = vsub.s32 %v1044, %v1046
          %v1048 = vrot.slane %v1034, %v1047
          %v1049 = vcombine.low %v1026, %v1041
          %v1050 = vcombine.high %v1026, %v1041
          %v1052 = vunpack.c.l.s4 1934713408
          %v1053 = vunpack.c.0.s8 %v1052
          %v1054 = vlaneseq
          %v1055 = vshrl.u32 %v1054, 7
          %v1056 = vsub.s32 %v1053, %v1055
          %v1057 = vrot.slane %v1049, %v1056
          %v1059 = vunpack.c.l.s4 1934713408
          %v1060 = vunpack.c.0.s8 %v1059
          %v1061 = vlaneseq
          %v1062 = vshrl.u32 %v1061, 7
          %v1063 = vsub.s32 %v1060, %v1062
          %v1064 = vrot.slane %v1050, %v1063
          %v1065 = vcombine.low %v1033, %v1048
          %v1066 = vcombine.high %v1033, %v1048
          %v1068 = vunpack.c.l.s4 1934713408
          %v1069 = vunpack.c.0.s8 %v1068
          %v1070 = vlaneseq
          %v1071 = vshrl.u32 %v1070, 7
          %v1072 = vsub.s32 %v1069, %v1071
          %v1073 = vrot.slane %v1065, %v1072
          %v1075 = vunpack.c.l.s4 1934713408
          %v1076 = vunpack.c.0.s8 %v1075
          %v1077 = vlaneseq
          %v1078 = vshrl.u32 %v1077, 7
          %v1079 = vsub.s32 %v1076, %v1078
          %v1080 = vrot.slane %v1066, %v1079
          %v1081 = vcombine.high %v1057, 0
          %v1082 = vcombine.high %v1064, 0
          %v1083 = vcombine.high %v1073, 0
          %v1084 = vcombine.high %v1080, 0
          %v1085 = vcombine.low %v991, %v998
          %v1087 = vunpack.c.l.s4 1983009808
          %v1088 = vunpack.c.0.s8 %v1087
          %v1089 = vlaneseq
          %v1090 = vshrl.u32 %v1089, 7
          %v1091 = vsub.s32 %v1088, %v1090
          %v1092 = vrot.slane %v1085, %v1091
          %v1093 = vcombine.low %v1015, %v1016
          %v1095 = vunpack.c.l.s4 1983009808
          %v1096 = vunpack.c.0.s8 %v1095
          %v1097 = vlaneseq
          %v1098 = vshrl.u32 %v1097, 7
          %v1099 = vsub.s32 %v1096, %v1098
          %v1100 = vrot.slane %v1093, %v1099
          %v1101 = vcombine.low %v1007, %v1014
          %v1103 = vunpack.c.l.s4 1983009808
          %v1104 = vunpack.c.0.s8 %v1103
          %v1105 = vlaneseq
          %v1106 = vshrl.u32 %v1105, 7
          %v1107 = vsub.s32 %v1104, %v1106
          %v1108 = vrot.slane %v1101, %v1107
          %v1109 = vcombine.low %v1017, %v1018
          %v1111 = vunpack.c.l.s4 1983009808
          %v1112 = vunpack.c.0.s8 %v1111
          %v1113 = vlaneseq
          %v1114 = vshrl.u32 %v1113, 7
          %v1115 = vsub.s32 %v1112, %v1114
          %v1116 = vrot.slane %v1109, %v1115
          %v1117 = vcombine.low %v1092, %v1100
          %v1119 = vunpack.c.l.s4 1934713408
          %v1120 = vunpack.c.0.s8 %v1119
          %v1121 = vlaneseq
          %v1122 = vshrl.u32 %v1121, 7
          %v1123 = vsub.s32 %v1120, %v1122
          %v1124 = vrot.slane %v1117, %v1123
          %v1125 = vcombine.low %v1108, %v1116
          %v1127 = vunpack.c.l.s4 1934713408
          %v1128 = vunpack.c.0.s8 %v1127
          %v1129 = vlaneseq
          %v1130 = vshrl.u32 %v1129, 7
          %v1131 = vsub.s32 %v1128, %v1130
          %v1132 = vrot.slane %v1125, %v1131
          %v1133 = vcombine.low %v1124, %v1132
          %v1134 = vcombine.high %v1124, %v1132
          %v1135 = vcombine.low %v1057, %v1064
          %v1137 = vunpack.c.l.s4 1983009808
          %v1138 = vunpack.c.0.s8 %v1137
          %v1139 = vlaneseq
          %v1140 = vshrl.u32 %v1139, 7
          %v1141 = vsub.s32 %v1138, %v1140
          %v1142 = vrot.slane %v1135, %v1141
          %v1143 = vcombine.low %v1081, %v1082
          %v1145 = vunpack.c.l.s4 1983009808
          %v1146 = vunpack.c.0.s8 %v1145
          %v1147 = vlaneseq
          %v1148 = vshrl.u32 %v1147, 7
          %v1149 = vsub.s32 %v1146, %v1148
          %v1150 = vrot.slane %v1143, %v1149
          %v1151 = vcombine.low %v1073, %v1080
          %v1153 = vunpack.c.l.s4 1983009808
          %v1154 = vunpack.c.0.s8 %v1153
          %v1155 = vlaneseq
          %v1156 = vshrl.u32 %v1155, 7
          %v1157 = vsub.s32 %v1154, %v1156
          %v1158 = vrot.slane %v1151, %v1157
          %v1159 = vcombine.low %v1083, %v1084
          %v1161 = vunpack.c.l.s4 1983009808
          %v1162 = vunpack.c.0.s8 %v1161
          %v1163 = vlaneseq
          %v1164 = vshrl.u32 %v1163, 7
          %v1165 = vsub.s32 %v1162, %v1164
          %v1166 = vrot.slane %v1159, %v1165
          %v1167 = vcombine.low %v1142, %v1150
          %v1169 = vunpack.c.l.s4 1934713408
          %v1170 = vunpack.c.0.s8 %v1169
          %v1171 = vlaneseq
          %v1172 = vshrl.u32 %v1171, 7
          %v1173 = vsub.s32 %v1170, %v1172
          %v1174 = vrot.slane %v1167, %v1173
          %v1175 = vcombine.low %v1158, %v1166
          %v1177 = vunpack.c.l.s4 1934713408
          %v1178 = vunpack.c.0.s8 %v1177
          %v1179 = vlaneseq
          %v1180 = vshrl.u32 %v1179, 7
          %v1181 = vsub.s32 %v1178, %v1180
          %v1182 = vrot.slane %v1175, %v1181
          %v1183 = vcombine.low %v1174, %v1182
          %v1184 = vcombine.high %v1174, %v1182
          %v1187 = vpack.i.b16 %v1183, %v1133
          %v1188 = vshrl.u32 %v1133, 16
          %v1189 = vshrl.u32 %v1183, 16
          %v1190 = vpack.i.b16 %v1189, %v1188
          %v1193 = vpack.i.b16 %v1184, %v1134
          %v1194 = vshrl.u32 %v1134, 16
          %v1195 = vshrl.u32 %v1184, 16
          %v1196 = vpack.i.b16 %v1195, %v1194
          %v1197 = vunpack.c.l.b16 %v1187
          %v1198 = vunpack.c.h.b16 %v1187
          %v1199 = vunpack.c.l.b16 %v1190
          %v1200 = vunpack.c.h.b16 %v1190
          %v1201 = vunpack.c.l.b16 %v1193
          %v1202 = vunpack.c.h.b16 %v1193
          %v1203 = vunpack.c.l.b16 %v1196
          %v1204 = vunpack.c.h.b16 %v1196
          %v1205 = vpack.c.b16 %v1197, %v1197
          %v1206 = vpack.c.b16 %v1198, %v1198
          %v1207 = vpack.c.b16 %v1199, %v1199
          %v1208 = vpack.c.b16 %v1200, %v1200
          %v1209 = vpack.c.b16 %v1201, %v1201
          %v1210 = vpack.c.b16 %v1202, %v1202
          %v1211 = vpack.c.b16 %v1203, %v1203
          %v1212 = vpack.c.b16 %v1204, %v1204
          %1221 = vst.msk [vmem:[#allocation3] sm:$0xf] %vm920, %v1205
          %1222 = vst.msk [vmem:[#allocation3 + $0x4] sm:$0xf] %vm920, %v1206
          %1223 = vst.msk [vmem:[#allocation3 + $0x8] sm:$0xf] %vm920, %v1207
          %1224 = vst.msk [vmem:[#allocation3 + $0xc] sm:$0xf] %vm920, %v1208
          %1225 = vst.msk [vmem:[#allocation3 + $0x10] sm:$0xf] %vm920, %v1209
          %1226 = vst.msk [vmem:[#allocation3 + $0x14] sm:$0xf] %vm920, %v1210
          %1227 = vst.msk [vmem:[#allocation3 + $0x18] sm:$0xf] %vm920, %v1211
          %1228 = vst.msk [vmem:[#allocation3 + $0x1c] sm:$0xf] %vm920, %v1212
        $region96: #{tpu_custom_call.1} parent=67 // pred_fallthru
          _
        %s1229 = smul.u32 %s35, 8
        %s1230 = scalar_lea.vmem %s507, %s1229
        %v1231 = vld [vmem:[%s1230] sm:$0xff]
        %vm1232 = vcmask 261120
        %v1233 = vsel %vm1232, %v1231, 0.0
        %1234 = vadd.xlane.f32.xlu0 %v1233
        %v1235 = vpop.xlane.xlu0 %1234
        %v1236 = vrcp.pop 32.0
        %v1237 = vmul.f32 %v1235, %v1236
        %v1238 = vsub.f32 %v1231, %v1237
        %v1239 = vmul.f32 %v1238, %v1238
        %v1240 = vsel %vm1232, %v1239, 0.0
        %1241 = vadd.xlane.f32.xlu0 %v1240
        %v1242 = vpop.xlane.xlu0 %1241
        %v1243 = vmul.f32 %v1242, %v1236
        %v1244 = vadd.f32 %v1243, 1e-06
        %v1245 = vrsqrt.pop %v1244
        %v1246 = vmul.f32 %v1238, %v1245
        %v1248 = vlaneseq
        %v1249 = vshrl.u32 %v1248, 7
        %v1250 = vsub.s32 0, %v1249
        %v1251 = vrot.slane %v509, %v1250
        %v1253 = vmul.f32 %v1246, %v1251
        %v1255 = vlaneseq
        %v1256 = vshrl.u32 %v1255, 7
        %v1257 = vsub.s32 0, %v1256
        %v1258 = vrot.slane %v510, %v1257
        %v1260 = vadd.f32 %v1253, %v1258
        %v1261 = vpack.c.bf16 %v1260, %v1260
        %v1262 = vld [vmem:[%s3] sm:$0xf]
        %v1263 = vld [vmem:[%s3 + $0x4] sm:$0xf]
        %v1264 = vld [vmem:[%s3 + $0x8] sm:$0xf]
        %v1265 = vld [vmem:[%s3 + $0xc] sm:$0xf]
        %v1270 = vunpack.c.l.b16 %v1262
        %v1271 = vunpack.c.l.b16 %v1263
        %v1272 = vunpack.c.l.b16 %v1264
        %v1273 = vunpack.c.l.b16 %v1265
        %v1274 = vpack.c.b16 %v1271, %v1270
        %v1275 = vpack.c.b16 %v1273, %v1272
        %v1279 = vsel %vm1232, %v1261, 0
        %1281 = vmatprep.subr.bf16.mxu0 0
        %1282 = vmatpush1.bf16.msra.mxu0 0
        %1283 = vmatprep.subr.bf16.mxu0 0
        %1284 = vmatpush1.bf16.msra.mxu0 0
        %1285 = vmatprep.subr.bf16.mxu0 0
        %1286 = vmatpush1.bf16.msra.mxu0 0
        %1287 = vmatprep.subr.bf16.mxu0 0
        %1288 = vmatpush1.bf16.msra.mxu0 0
        %1289 = vmatprep.subr.bf16.mxu0 0
        %1290 = vmatpush1.bf16.msra.mxu0 0
        %1291 = vmatprep.subr.bf16.mxu0 0
        %1292 = vmatpush1.bf16.msra.mxu0 0
        %1293 = vmatprep.subr.bf16.mxu0 0
        %1294 = vmatpush1.bf16.msra.mxu0 %v1275
        %1295 = vmatprep.subr.bf16.mxu0 0
        %1296 = vmatpush1.bf16.msra.mxu0 %v1274
        %1297 = vmatprep.subr.bf16.mxu0 0
        %1298 = vmatpush2.bf16.msra.mxu0 0
        %1299 = vmatprep.subr.bf16.mxu0 0
        %1300 = vmatpush2.bf16.msra.mxu0 0
        %1301 = vmatprep.subr.bf16.mxu0 0
        %1302 = vmatpush2.bf16.msra.mxu0 0
        %1303 = vmatprep.subr.bf16.mxu0 0
        %1304 = vmatpush2.bf16.msra.mxu0 0
        %1305 = vmatprep.subr.bf16.mxu0 0
        %1306 = vmatpush2.bf16.msra.mxu0 0
        %1307 = vmatprep.subr.bf16.mxu0 0
        %1308 = vmatpush2.bf16.msra.mxu0 0
        %1309 = vmatprep.subr.bf16.mxu0 0
        %1310 = vmatpush2.bf16.msra.mxu0 0
        %1311 = vmatprep.subr.bf16.mxu0 0
        %1312 = vmatpush2.bf16.msra.mxu0 0
        %1313 = vmatprep.mubr.bf16.mxu0 0
        %1314 = vmatmul.mubr.bf16.gmra.mxu0 %v1279
        %v1315 = vpop.f32.mrf.mxu0
        %v1316 = vadd.f32 0.0, %v1315
        %v1317 = vpop.f32.mrf.mxu0
        %v1318 = vpop.f32.mrf.mxu0
        %v1319 = vpop.f32.mrf.mxu0
        %1320 = vdwg.mxu0
        %v1321 = vpack.c.bf16 %v1316, %v1316
        %1323 = vrot.lane.b32.xlu0 %v1321, 120
        %v1324 = vpop.permute.xlu0 %1323
        %1325 = vrot.lane.b32.xlu0 %v1321, 112
        %v1326 = vpop.permute.xlu0 %1325
        %1327 = vrot.lane.b32.xlu0 %v1321, 104
        %v1328 = vpop.permute.xlu0 %1327
        %v1330 = vunpack.c.l.s4 1983009808
        %v1331 = vunpack.c.0.s8 %v1330
        %v1332 = vlaneseq
        %v1333 = vshrl.u32 %v1332, 7
        %v1334 = vsub.s32 %v1331, %v1333
        %v1335 = vrot.slane %v1321, %v1334
        %v1338 = vunpack.c.l.s4 1983009808
        %v1339 = vunpack.c.0.s8 %v1338
        %v1340 = vlaneseq
        %v1341 = vshrl.u32 %v1340, 7
        %v1342 = vsub.s32 %v1339, %v1341
        %v1343 = vrot.slane %v1326, %v1342
        %v1344 = vcombine.low %v1335, %v1343
        %v1345 = vcombine.high %v1335, %v1343
        %v1347 = vunpack.c.l.s4 1934713408
        %v1348 = vunpack.c.0.s8 %v1347
        %v1349 = vlaneseq
        %v1350 = vshrl.u32 %v1349, 7
        %v1351 = vsub.s32 %v1348, %v1350
        %v1352 = vrot.slane %v1344, %v1351
        %v1354 = vunpack.c.l.s4 1934713408
        %v1355 = vunpack.c.0.s8 %v1354
        %v1356 = vlaneseq
        %v1357 = vshrl.u32 %v1356, 7
        %v1358 = vsub.s32 %v1355, %v1357
        %v1359 = vrot.slane %v1345, %v1358
        %v1360 = vcombine.high %v1352, 0
        %v1361 = vcombine.high %v1359, 0
        %v1364 = vunpack.c.l.s4 1983009808
        %v1365 = vunpack.c.0.s8 %v1364
        %v1366 = vlaneseq
        %v1367 = vshrl.u32 %v1366, 7
        %v1368 = vsub.s32 %v1365, %v1367
        %v1369 = vrot.slane %v1324, %v1368
        %v1372 = vunpack.c.l.s4 1983009808
        %v1373 = vunpack.c.0.s8 %v1372
        %v1374 = vlaneseq
        %v1375 = vshrl.u32 %v1374, 7
        %v1376 = vsub.s32 %v1373, %v1375
        %v1377 = vrot.slane %v1328, %v1376
        %v1378 = vcombine.low %v1369, %v1377
        %v1379 = vcombine.high %v1369, %v1377
        %v1381 = vunpack.c.l.s4 1934713408
        %v1382 = vunpack.c.0.s8 %v1381
        %v1383 = vlaneseq
        %v1384 = vshrl.u32 %v1383, 7
        %v1385 = vsub.s32 %v1382, %v1384
        %v1386 = vrot.slane %v1378, %v1385
        %v1388 = vunpack.c.l.s4 1934713408
        %v1389 = vunpack.c.0.s8 %v1388
        %v1390 = vlaneseq
        %v1391 = vshrl.u32 %v1390, 7
        %v1392 = vsub.s32 %v1389, %v1391
        %v1393 = vrot.slane %v1379, %v1392
        %v1394 = vcombine.high %v1386, 0
        %v1395 = vcombine.high %v1393, 0
        %v1398 = vpack.i.b16 %v1386, %v1352
        %v1400 = vshrl.u32 %v1352, 16
        %v1401 = vshrl.u32 %v1386, 16
        %v1402 = vpack.i.b16 %v1401, %v1400
        %v1406 = vpack.i.b16 %v1394, %v1360
        %v1408 = vshrl.u32 %v1360, 16
        %v1409 = vshrl.u32 %v1394, 16
        %v1410 = vpack.i.b16 %v1409, %v1408
        %v1414 = vpack.i.b16 %v1393, %v1359
        %v1416 = vshrl.u32 %v1359, 16
        %v1417 = vshrl.u32 %v1393, 16
        %v1418 = vpack.i.b16 %v1417, %v1416
        %v1422 = vpack.i.b16 %v1395, %v1361
        %v1424 = vshrl.u32 %v1361, 16
        %v1425 = vshrl.u32 %v1395, 16
        %v1426 = vpack.i.b16 %v1425, %v1424
        %v1428 = vcombine.low %v1398, %v1414
        %v1430 = vunpack.c.l.s4 1983009808
        %v1431 = vunpack.c.0.s8 %v1430
        %v1432 = vlaneseq
        %v1433 = vshrl.u32 %v1432, 7
        %v1434 = vsub.s32 %v1431, %v1433
        %v1435 = vrot.slane %v1428, %v1434
        %v1436 = vcombine.low %v1406, %v1422
        %v1438 = vunpack.c.l.s4 1983009808
        %v1439 = vunpack.c.0.s8 %v1438
        %v1440 = vlaneseq
        %v1441 = vshrl.u32 %v1440, 7
        %v1442 = vsub.s32 %v1439, %v1441
        %v1443 = vrot.slane %v1436, %v1442
        %v1444 = vcombine.low %v1435, %v1443
        %v1446 = vunpack.c.l.s4 1934713408
        %v1447 = vunpack.c.0.s8 %v1446
        %v1448 = vlaneseq
        %v1449 = vshrl.u32 %v1448, 7
        %v1450 = vsub.s32 %v1447, %v1449
        %v1451 = vrot.slane %v1444, %v1450
        %v1452 = vcombine.high %v1451, 0
        %v1453 = vcombine.low %v1402, %v1418
        %v1455 = vunpack.c.l.s4 1983009808
        %v1456 = vunpack.c.0.s8 %v1455
        %v1457 = vlaneseq
        %v1458 = vshrl.u32 %v1457, 7
        %v1459 = vsub.s32 %v1456, %v1458
        %v1460 = vrot.slane %v1453, %v1459
        %v1461 = vcombine.low %v1410, %v1426
        %v1463 = vunpack.c.l.s4 1983009808
        %v1464 = vunpack.c.0.s8 %v1463
        %v1465 = vlaneseq
        %v1466 = vshrl.u32 %v1465, 7
        %v1467 = vsub.s32 %v1464, %v1466
        %v1468 = vrot.slane %v1461, %v1467
        %v1469 = vcombine.low %v1460, %v1468
        %v1471 = vunpack.c.l.s4 1934713408
        %v1472 = vunpack.c.0.s8 %v1471
        %v1473 = vlaneseq
        %v1474 = vshrl.u32 %v1473, 7
        %v1475 = vsub.s32 %v1472, %v1474
        %v1476 = vrot.slane %v1469, %v1475
        %v1477 = vcombine.high %v1476, 0
        %v1480 = vpack.i.b16 %v1476, %v1451
        %v1481 = vshrl.u32 %v1451, 16
        %v1482 = vshrl.u32 %v1476, 16
        %v1483 = vpack.i.b16 %v1482, %v1481
        %v1486 = vpack.i.b16 %v1477, %v1452
        %v1487 = vshrl.u32 %v1452, 16
        %v1488 = vshrl.u32 %v1477, 16
        %v1489 = vpack.i.b16 %v1488, %v1487
        %v1490 = vld [vmem:[#allocation2] sm:$0xf]
        %v1491 = vld [vmem:[#allocation2 + $0x4] sm:$0xf]
        %v1492 = vld [vmem:[#allocation2 + $0x8] sm:$0xf]
        %v1493 = vld [vmem:[#allocation2 + $0xc] sm:$0xf]
        %v1494 = vld [vmem:[#allocation2 + $0x10] sm:$0xf]
        %v1495 = vld [vmem:[#allocation2 + $0x14] sm:$0xf]
        %v1496 = vld [vmem:[#allocation2 + $0x18] sm:$0xf]
        %v1497 = vld [vmem:[#allocation2 + $0x1c] sm:$0xf]
        %v1500 = vunpack.c.l.b16 %v1490
        %v1501 = vunpack.c.l.b16 %v1491
        %v1502 = vpack.c.b16 %v1501, %v1500
        %vm1503 = vcmask 64512
        %v1505 = vsel %vm1503, %v1480, 0
        %v1508 = vsel %vm1503, %v1502, 0
        %1510 = vmatprep.subr.bf16.mxu0 0
        %1511 = vmatpush1.bf16.xpose.msra.mxu0 0
        %1512 = vmatprep.subr.bf16.mxu0 0
        %1513 = vmatpush1.bf16.xpose.msra.mxu0 0
        %1514 = vmatprep.subr.bf16.mxu0 0
        %1515 = vmatpush1.bf16.xpose.msra.mxu0 0
        %1516 = vmatprep.subr.bf16.mxu0 0
        %1517 = vmatpush1.bf16.xpose.msra.mxu0 0
        %1518 = vmatprep.subr.bf16.mxu0 0
        %1519 = vmatpush1.bf16.xpose.msra.mxu0 0
        %1520 = vmatprep.subr.bf16.mxu0 0
        %1521 = vmatpush1.bf16.xpose.msra.mxu0 0
        %1522 = vmatprep.subr.bf16.mxu0 0
        %1523 = vmatpush1.bf16.xpose.msra.mxu0 0
        %1524 = vmatprep.subr.bf16.mxu0 0
        %1525 = vmatpush1.bf16.xpose.msra.mxu0 %v1508
        %1526 = vmatprep.subr.bf16.mxu0 0
        %1527 = vmatpush2.bf16.xpose.msra.mxu0 0
        %1528 = vmatprep.subr.bf16.mxu0 0
        %1529 = vmatpush2.bf16.xpose.msra.mxu0 0
        %1530 = vmatprep.subr.bf16.mxu0 0
        %1531 = vmatpush2.bf16.xpose.msra.mxu0 0
        %1532 = vmatprep.subr.bf16.mxu0 0
        %1533 = vmatpush2.bf16.xpose.msra.mxu0 0
        %1534 = vmatprep.subr.bf16.mxu0 0
        %1535 = vmatpush2.bf16.xpose.msra.mxu0 0
        %1536 = vmatprep.subr.bf16.mxu0 0
        %1537 = vmatpush2.bf16.xpose.msra.mxu0 0
        %1538 = vmatprep.subr.bf16.mxu0 0
        %1539 = vmatpush2.bf16.xpose.msra.mxu0 0
        %1540 = vmatprep.subr.bf16.mxu0 0
        %1541 = vmatpush2.bf16.xpose.msra.mxu0 0
        %1542 = vmatprep.mubr.bf16.mxu0 0
        %1543 = vmatmul.mubr.bf16.gmra.mxu0 %v1505
        %v1544 = vpop.f32.mrf.mxu0
        %v1545 = vadd.f32 0.0, %v1544
        %v1546 = vpop.f32.mrf.mxu0
        %v1547 = vpop.f32.mrf.mxu0
        %v1548 = vpop.f32.mrf.mxu0
        %1549 = vdwg.mxu0
        %v1552 = vunpack.c.l.b16 %v1492
        %v1553 = vunpack.c.l.b16 %v1493
        %v1554 = vpack.c.b16 %v1553, %v1552
        %v1556 = vsel %vm1503, %v1483, 0
        %v1559 = vsel %vm1503, %v1554, 0
        %1561 = vmatprep.subr.bf16.mxu0 0
        %1562 = vmatpush1.bf16.xpose.msra.mxu0 0
        %1563 = vmatprep.subr.bf16.mxu0 0
        %1564 = vmatpush1.bf16.xpose.msra.mxu0 0
        %1565 = vmatprep.subr.bf16.mxu0 0
        %1566 = vmatpush1.bf16.xpose.msra.mxu0 0
        %1567 = vmatprep.subr.bf16.mxu0 0
        %1568 = vmatpush1.bf16.xpose.msra.mxu0 0
        %1569 = vmatprep.subr.bf16.mxu0 0
        %1570 = vmatpush1.bf16.xpose.msra.mxu0 0
        %1571 = vmatprep.subr.bf16.mxu0 0
        %1572 = vmatpush1.bf16.xpose.msra.mxu0 0
        %1573 = vmatprep.subr.bf16.mxu0 0
        %1574 = vmatpush1.bf16.xpose.msra.mxu0 0
        %1575 = vmatprep.subr.bf16.mxu0 0
        %1576 = vmatpush1.bf16.xpose.msra.mxu0 %v1559
        %1577 = vmatprep.subr.bf16.mxu0 0
        %1578 = vmatpush2.bf16.xpose.msra.mxu0 0
        %1579 = vmatprep.subr.bf16.mxu0 0
        %1580 = vmatpush2.bf16.xpose.msra.mxu0 0
        %1581 = vmatprep.subr.bf16.mxu0 0
        %1582 = vmatpush2.bf16.xpose.msra.mxu0 0
        %1583 = vmatprep.subr.bf16.mxu0 0
        %1584 = vmatpush2.bf16.xpose.msra.mxu0 0
        %1585 = vmatprep.subr.bf16.mxu0 0
        %1586 = vmatpush2.bf16.xpose.msra.mxu0 0
        %1587 = vmatprep.subr.bf16.mxu0 0
        %1588 = vmatpush2.bf16.xpose.msra.mxu0 0
        %1589 = vmatprep.subr.bf16.mxu0 0
        %1590 = vmatpush2.bf16.xpose.msra.mxu0 0
        %1591 = vmatprep.subr.bf16.mxu0 0
        %1592 = vmatpush2.bf16.xpose.msra.mxu0 0
        %1593 = vmatprep.mubr.bf16.mxu0 0
        %1594 = vmatmul.mubr.bf16.gmra.mxu0 %v1556
        %v1595 = vpop.f32.mrf.mxu0
        %v1596 = vadd.f32 0.0, %v1595
        %v1597 = vpop.f32.mrf.mxu0
        %v1598 = vpop.f32.mrf.mxu0
        %v1599 = vpop.f32.mrf.mxu0
        %1600 = vdwg.mxu0
        %v1603 = vunpack.c.l.b16 %v1494
        %v1604 = vunpack.c.l.b16 %v1495
        %v1605 = vpack.c.b16 %v1604, %v1603
        %v1607 = vsel %vm1503, %v1486, 0
        %v1610 = vsel %vm1503, %v1605, 0
        %1612 = vmatprep.subr.bf16.mxu0 0
        %1613 = vmatpush1.bf16.xpose.msra.mxu0 0
        %1614 = vmatprep.subr.bf16.mxu0 0
        %1615 = vmatpush1.bf16.xpose.msra.mxu0 0
        %1616 = vmatprep.subr.bf16.mxu0 0
        %1617 = vmatpush1.bf16.xpose.msra.mxu0 0
        %1618 = vmatprep.subr.bf16.mxu0 0
        %1619 = vmatpush1.bf16.xpose.msra.mxu0 0
        %1620 = vmatprep.subr.bf16.mxu0 0
        %1621 = vmatpush1.bf16.xpose.msra.mxu0 0
        %1622 = vmatprep.subr.bf16.mxu0 0
        %1623 = vmatpush1.bf16.xpose.msra.mxu0 0
        %1624 = vmatprep.subr.bf16.mxu0 0
        %1625 = vmatpush1.bf16.xpose.msra.mxu0 0
        %1626 = vmatprep.subr.bf16.mxu0 0
        %1627 = vmatpush1.bf16.xpose.msra.mxu0 %v1610
        %1628 = vmatprep.subr.bf16.mxu0 0
        %1629 = vmatpush2.bf16.xpose.msra.mxu0 0
        %1630 = vmatprep.subr.bf16.mxu0 0
        %1631 = vmatpush2.bf16.xpose.msra.mxu0 0
        %1632 = vmatprep.subr.bf16.mxu0 0
        %1633 = vmatpush2.bf16.xpose.msra.mxu0 0
        %1634 = vmatprep.subr.bf16.mxu0 0
        %1635 = vmatpush2.bf16.xpose.msra.mxu0 0
        %1636 = vmatprep.subr.bf16.mxu0 0
        %1637 = vmatpush2.bf16.xpose.msra.mxu0 0
        %1638 = vmatprep.subr.bf16.mxu0 0
        %1639 = vmatpush2.bf16.xpose.msra.mxu0 0
        %1640 = vmatprep.subr.bf16.mxu0 0
        %1641 = vmatpush2.bf16.xpose.msra.mxu0 0
        %1642 = vmatprep.subr.bf16.mxu0 0
        %1643 = vmatpush2.bf16.xpose.msra.mxu0 0
        %1644 = vmatprep.mubr.bf16.mxu0 0
        %1645 = vmatmul.mubr.bf16.gmra.mxu0 %v1607
        %v1646 = vpop.f32.mrf.mxu0
        %v1647 = vadd.f32 0.0, %v1646
        %v1648 = vpop.f32.mrf.mxu0
        %v1649 = vpop.f32.mrf.mxu0
        %v1650 = vpop.f32.mrf.mxu0
        %1651 = vdwg.mxu0
        %v1654 = vunpack.c.l.b16 %v1496
        %v1655 = vunpack.c.l.b16 %v1497
        %v1656 = vpack.c.b16 %v1655, %v1654
        %v1658 = vsel %vm1503, %v1489, 0
        %v1661 = vsel %vm1503, %v1656, 0
        %1663 = vmatprep.subr.bf16.mxu0 0
        %1664 = vmatpush1.bf16.xpose.msra.mxu0 0
        %1665 = vmatprep.subr.bf16.mxu0 0
        %1666 = vmatpush1.bf16.xpose.msra.mxu0 0
        %1667 = vmatprep.subr.bf16.mxu0 0
        %1668 = vmatpush1.bf16.xpose.msra.mxu0 0
        %1669 = vmatprep.subr.bf16.mxu0 0
        %1670 = vmatpush1.bf16.xpose.msra.mxu0 0
        %1671 = vmatprep.subr.bf16.mxu0 0
        %1672 = vmatpush1.bf16.xpose.msra.mxu0 0
        %1673 = vmatprep.subr.bf16.mxu0 0
        %1674 = vmatpush1.bf16.xpose.msra.mxu0 0
        %1675 = vmatprep.subr.bf16.mxu0 0
        %1676 = vmatpush1.bf16.xpose.msra.mxu0 0
        %1677 = vmatprep.subr.bf16.mxu0 0
        %1678 = vmatpush1.bf16.xpose.msra.mxu0 %v1661
        %1679 = vmatprep.subr.bf16.mxu0 0
        %1680 = vmatpush2.bf16.xpose.msra.mxu0 0
        %1681 = vmatprep.subr.bf16.mxu0 0
        %1682 = vmatpush2.bf16.xpose.msra.mxu0 0
        %1683 = vmatprep.subr.bf16.mxu0 0
        %1684 = vmatpush2.bf16.xpose.msra.mxu0 0
        %1685 = vmatprep.subr.bf16.mxu0 0
        %1686 = vmatpush2.bf16.xpose.msra.mxu0 0
        %1687 = vmatprep.subr.bf16.mxu0 0
        %1688 = vmatpush2.bf16.xpose.msra.mxu0 0
        %1689 = vmatprep.subr.bf16.mxu0 0
        %1690 = vmatpush2.bf16.xpose.msra.mxu0 0
        %1691 = vmatprep.subr.bf16.mxu0 0
        %1692 = vmatpush2.bf16.xpose.msra.mxu0 0
        %1693 = vmatprep.subr.bf16.mxu0 0
        %1694 = vmatpush2.bf16.xpose.msra.mxu0 0
        %1695 = vmatprep.mubr.bf16.mxu0 0
        %1696 = vmatmul.mubr.bf16.gmra.mxu0 %v1658
        %v1697 = vpop.f32.mrf.mxu0
        %v1698 = vadd.f32 0.0, %v1697
        %v1699 = vpop.f32.mrf.mxu0
        %v1700 = vpop.f32.mrf.mxu0
        %v1701 = vpop.f32.mrf.mxu0
        %1702 = vdwg.mxu0
        %vm1703 = vcmask 130048
        %v1704 = vsel %vm1703, %v1545, -inf
        %1705 = vmax.xlane.f32.xlu0 %v1704
        %v1706 = vpop.xlane.xlu0 %1705
        %v1707 = vsel %vm1703, %v1596, -inf
        %1708 = vmax.xlane.f32.xlu0 %v1707
        %v1709 = vpop.xlane.xlu0 %1708
        %v1710 = vsel %vm1703, %v1647, -inf
        %1711 = vmax.xlane.f32.xlu0 %v1710
        %v1712 = vpop.xlane.xlu0 %1711
        %v1713 = vsel %vm1703, %v1698, -inf
        %1714 = vmax.xlane.f32.xlu0 %v1713
        %v1715 = vpop.xlane.xlu0 %1714
        %v1716 = vsub.f32 %v1545, %v1706
        %v1717 = vsub.f32 %v1596, %v1709
        %v1718 = vsub.f32 %v1647, %v1712
        %v1719 = vsub.f32 %v1698, %v1715
        %v1720 = vmul.f32 %v1716, 1.442695
        %v1721 = vpow.pop %v1720
        %v1722 = vmul.f32 %v1717, 1.442695
        %v1723 = vpow.pop %v1722
        %v1724 = vmul.f32 %v1718, 1.442695
        %v1725 = vpow.pop %v1724
        %v1726 = vmul.f32 %v1719, 1.442695
        %v1727 = vpow.pop %v1726
        %v1728 = vsel %vm1703, %v1721, 0.0
        %1729 = vadd.xlane.f32.xlu0 %v1728
        %v1730 = vpop.xlane.xlu0 %1729
        %v1731 = vsel %vm1703, %v1723, 0.0
        %1732 = vadd.xlane.f32.xlu0 %v1731
        %v1733 = vpop.xlane.xlu0 %1732
        %v1734 = vsel %vm1703, %v1725, 0.0
        %1735 = vadd.xlane.f32.xlu0 %v1734
        %v1736 = vpop.xlane.xlu0 %1735
        %v1737 = vsel %vm1703, %v1727, 0.0
        %1738 = vadd.xlane.f32.xlu0 %v1737
        %v1739 = vpop.xlane.xlu0 %1738
        %v1740 = vpack.c.bf16 %v1721, %v1721
        %v1741 = vpack.c.bf16 %v1723, %v1723
        %v1742 = vpack.c.bf16 %v1725, %v1725
        %v1743 = vpack.c.bf16 %v1727, %v1727
        %v1744 = vld [vmem:[#allocation3] sm:$0xf]
        %v1745 = vld [vmem:[#allocation3 + $0x4] sm:$0xf]
        %v1746 = vld [vmem:[#allocation3 + $0x8] sm:$0xf]
        %v1747 = vld [vmem:[#allocation3 + $0xc] sm:$0xf]
        %v1748 = vld [vmem:[#allocation3 + $0x10] sm:$0xf]
        %v1749 = vld [vmem:[#allocation3 + $0x14] sm:$0xf]
        %v1750 = vld [vmem:[#allocation3 + $0x18] sm:$0xf]
        %v1751 = vld [vmem:[#allocation3 + $0x1c] sm:$0xf]
        %v1754 = vunpack.c.l.b16 %v1744
        %v1755 = vunpack.c.l.b16 %v1745
        %v1756 = vpack.c.b16 %v1755, %v1754
        %v1759 = vsel %vm1703, %v1740, 0
        %1761 = vmatprep.subr.bf16.mxu0 0
        %1762 = vmatpush1.bf16.msra.mxu0 0
        %1763 = vmatprep.subr.bf16.mxu0 0
        %1764 = vmatpush1.bf16.msra.mxu0 0
        %1765 = vmatprep.subr.bf16.mxu0 0
        %1766 = vmatpush1.bf16.msra.mxu0 0
        %1767 = vmatprep.subr.bf16.mxu0 0
        %1768 = vmatpush1.bf16.msra.mxu0 0
        %1769 = vmatprep.subr.bf16.mxu0 0
        %1770 = vmatpush1.bf16.msra.mxu0 0
        %1771 = vmatprep.subr.bf16.mxu0 0
        %1772 = vmatpush1.bf16.msra.mxu0 0
        %1773 = vmatprep.subr.bf16.mxu0 0
        %1774 = vmatpush1.bf16.msra.mxu0 0
        %1775 = vmatprep.subr.bf16.mxu0 0
        %1776 = vmatpush1.bf16.msra.mxu0 %v1756
        %1777 = vmatprep.subr.bf16.mxu0 0
        %1778 = vmatpush2.bf16.msra.mxu0 0
        %1779 = vmatprep.subr.bf16.mxu0 0
        %1780 = vmatpush2.bf16.msra.mxu0 0
        %1781 = vmatprep.subr.bf16.mxu0 0
        %1782 = vmatpush2.bf16.msra.mxu0 0
        %1783 = vmatprep.subr.bf16.mxu0 0
        %1784 = vmatpush2.bf16.msra.mxu0 0
        %1785 = vmatprep.subr.bf16.mxu0 0
        %1786 = vmatpush2.bf16.msra.mxu0 0
        %1787 = vmatprep.subr.bf16.mxu0 0
        %1788 = vmatpush2.bf16.msra.mxu0 0
        %1789 = vmatprep.subr.bf16.mxu0 0
        %1790 = vmatpush2.bf16.msra.mxu0 0
        %1791 = vmatprep.subr.bf16.mxu0 0
        %1792 = vmatpush2.bf16.msra.mxu0 0
        %1793 = vmatprep.mubr.bf16.mxu0 0
        %1794 = vmatmul.mubr.bf16.gmra.mxu0 %v1759
        %v1795 = vpop.f32.mrf.mxu0
        %v1796 = vadd.f32 0.0, %v1795
        %v1797 = vpop.f32.mrf.mxu0
        %v1798 = vpop.f32.mrf.mxu0
        %v1799 = vpop.f32.mrf.mxu0
        %1800 = vdwg.mxu0
        %v1803 = vunpack.c.l.b16 %v1746
        %v1804 = vunpack.c.l.b16 %v1747
        %v1805 = vpack.c.b16 %v1804, %v1803
        %v1808 = vsel %vm1703, %v1741, 0
        %1810 = vmatprep.subr.bf16.mxu0 0
        %1811 = vmatpush1.bf16.msra.mxu0 0
        %1812 = vmatprep.subr.bf16.mxu0 0
        %1813 = vmatpush1.bf16.msra.mxu0 0
        %1814 = vmatprep.subr.bf16.mxu0 0
        %1815 = vmatpush1.bf16.msra.mxu0 0
        %1816 = vmatprep.subr.bf16.mxu0 0
        %1817 = vmatpush1.bf16.msra.mxu0 0
        %1818 = vmatprep.subr.bf16.mxu0 0
        %1819 = vmatpush1.bf16.msra.mxu0 0
        %1820 = vmatprep.subr.bf16.mxu0 0
        %1821 = vmatpush1.bf16.msra.mxu0 0
        %1822 = vmatprep.subr.bf16.mxu0 0
        %1823 = vmatpush1.bf16.msra.mxu0 0
        %1824 = vmatprep.subr.bf16.mxu0 0
        %1825 = vmatpush1.bf16.msra.mxu0 %v1805
        %1826 = vmatprep.subr.bf16.mxu0 0
        %1827 = vmatpush2.bf16.msra.mxu0 0
        %1828 = vmatprep.subr.bf16.mxu0 0
        %1829 = vmatpush2.bf16.msra.mxu0 0
        %1830 = vmatprep.subr.bf16.mxu0 0
        %1831 = vmatpush2.bf16.msra.mxu0 0
        %1832 = vmatprep.subr.bf16.mxu0 0
        %1833 = vmatpush2.bf16.msra.mxu0 0
        %1834 = vmatprep.subr.bf16.mxu0 0
        %1835 = vmatpush2.bf16.msra.mxu0 0
        %1836 = vmatprep.subr.bf16.mxu0 0
        %1837 = vmatpush2.bf16.msra.mxu0 0
        %1838 = vmatprep.subr.bf16.mxu0 0
        %1839 = vmatpush2.bf16.msra.mxu0 0
        %1840 = vmatprep.subr.bf16.mxu0 0
        %1841 = vmatpush2.bf16.msra.mxu0 0
        %1842 = vmatprep.mubr.bf16.mxu0 0
        %1843 = vmatmul.mubr.bf16.gmra.mxu0 %v1808
        %v1844 = vpop.f32.mrf.mxu0
        %v1845 = vadd.f32 0.0, %v1844
        %v1846 = vpop.f32.mrf.mxu0
        %v1847 = vpop.f32.mrf.mxu0
        %v1848 = vpop.f32.mrf.mxu0
        %1849 = vdwg.mxu0
        %v1852 = vunpack.c.l.b16 %v1748
        %v1853 = vunpack.c.l.b16 %v1749
        %v1854 = vpack.c.b16 %v1853, %v1852
        %v1857 = vsel %vm1703, %v1742, 0
        %1859 = vmatprep.subr.bf16.mxu0 0
        %1860 = vmatpush1.bf16.msra.mxu0 0
        %1861 = vmatprep.subr.bf16.mxu0 0
        %1862 = vmatpush1.bf16.msra.mxu0 0
        %1863 = vmatprep.subr.bf16.mxu0 0
        %1864 = vmatpush1.bf16.msra.mxu0 0
        %1865 = vmatprep.subr.bf16.mxu0 0
        %1866 = vmatpush1.bf16.msra.mxu0 0
        %1867 = vmatprep.subr.bf16.mxu0 0
        %1868 = vmatpush1.bf16.msra.mxu0 0
        %1869 = vmatprep.subr.bf16.mxu0 0
        %1870 = vmatpush1.bf16.msra.mxu0 0
        %1871 = vmatprep.subr.bf16.mxu0 0
        %1872 = vmatpush1.bf16.msra.mxu0 0
        %1873 = vmatprep.subr.bf16.mxu0 0
        %1874 = vmatpush1.bf16.msra.mxu0 %v1854
        %1875 = vmatprep.subr.bf16.mxu0 0
        %1876 = vmatpush2.bf16.msra.mxu0 0
        %1877 = vmatprep.subr.bf16.mxu0 0
        %1878 = vmatpush2.bf16.msra.mxu0 0
        %1879 = vmatprep.subr.bf16.mxu0 0
        %1880 = vmatpush2.bf16.msra.mxu0 0
        %1881 = vmatprep.subr.bf16.mxu0 0
        %1882 = vmatpush2.bf16.msra.mxu0 0
        %1883 = vmatprep.subr.bf16.mxu0 0
        %1884 = vmatpush2.bf16.msra.mxu0 0
        %1885 = vmatprep.subr.bf16.mxu0 0
        %1886 = vmatpush2.bf16.msra.mxu0 0
        %1887 = vmatprep.subr.bf16.mxu0 0
        %1888 = vmatpush2.bf16.msra.mxu0 0
        %1889 = vmatprep.subr.bf16.mxu0 0
        %1890 = vmatpush2.bf16.msra.mxu0 0
        %1891 = vmatprep.mubr.bf16.mxu0 0
        %1892 = vmatmul.mubr.bf16.gmra.mxu0 %v1857
        %v1893 = vpop.f32.mrf.mxu0
        %v1894 = vadd.f32 0.0, %v1893
        %v1895 = vpop.f32.mrf.mxu0
        %v1896 = vpop.f32.mrf.mxu0
        %v1897 = vpop.f32.mrf.mxu0
        %1898 = vdwg.mxu0
        %v1901 = vunpack.c.l.b16 %v1750
        %v1902 = vunpack.c.l.b16 %v1751
        %v1903 = vpack.c.b16 %v1902, %v1901
        %v1906 = vsel %vm1703, %v1743, 0
        %1908 = vmatprep.subr.bf16.mxu0 0
        %1909 = vmatpush1.bf16.msra.mxu0 0
        %1910 = vmatprep.subr.bf16.mxu0 0
        %1911 = vmatpush1.bf16.msra.mxu0 0
        %1912 = vmatprep.subr.bf16.mxu0 0
        %1913 = vmatpush1.bf16.msra.mxu0 0
        %1914 = vmatprep.subr.bf16.mxu0 0
        %1915 = vmatpush1.bf16.msra.mxu0 0
        %1916 = vmatprep.subr.bf16.mxu0 0
        %1917 = vmatpush1.bf16.msra.mxu0 0
        %1918 = vmatprep.subr.bf16.mxu0 0
        %1919 = vmatpush1.bf16.msra.mxu0 0
        %1920 = vmatprep.subr.bf16.mxu0 0
        %1921 = vmatpush1.bf16.msra.mxu0 0
        %1922 = vmatprep.subr.bf16.mxu0 0
        %1923 = vmatpush1.bf16.msra.mxu0 %v1903
        %1924 = vmatprep.subr.bf16.mxu0 0
        %1925 = vmatpush2.bf16.msra.mxu0 0
        %1926 = vmatprep.subr.bf16.mxu0 0
        %1927 = vmatpush2.bf16.msra.mxu0 0
        %1928 = vmatprep.subr.bf16.mxu0 0
        %1929 = vmatpush2.bf16.msra.mxu0 0
        %1930 = vmatprep.subr.bf16.mxu0 0
        %1931 = vmatpush2.bf16.msra.mxu0 0
        %1932 = vmatprep.subr.bf16.mxu0 0
        %1933 = vmatpush2.bf16.msra.mxu0 0
        %1934 = vmatprep.subr.bf16.mxu0 0
        %1935 = vmatpush2.bf16.msra.mxu0 0
        %1936 = vmatprep.subr.bf16.mxu0 0
        %1937 = vmatpush2.bf16.msra.mxu0 0
        %1938 = vmatprep.subr.bf16.mxu0 0
        %1939 = vmatpush2.bf16.msra.mxu0 0
        %1940 = vmatprep.mubr.bf16.mxu0 0
        %1941 = vmatmul.mubr.bf16.gmra.mxu0 %v1906
        %v1942 = vpop.f32.mrf.mxu0
        %v1943 = vadd.f32 0.0, %v1942
        %v1944 = vpop.f32.mrf.mxu0
        %v1945 = vpop.f32.mrf.mxu0
        %v1946 = vpop.f32.mrf.mxu0
        %1947 = vdwg.mxu0
        %v1948 = vrcp.pop %v1730
        %v1949 = vrcp.pop %v1733
        %v1950 = vrcp.pop %v1736
        %v1951 = vrcp.pop %v1739
        %v1952 = vmul.f32 %v1796, %v1948
        %v1953 = vmul.f32 %v1845, %v1949
        %v1954 = vmul.f32 %v1894, %v1950
        %v1955 = vmul.f32 %v1943, %v1951
        %v1956 = vcombine.low %v1952, %v1954
        %v1957 = vcombine.high %v1952, %v1954
        %v1959 = vunpack.c.l.s4 1983009808
        %v1960 = vunpack.c.0.s8 %v1959
        %v1961 = vlaneseq
        %v1962 = vshrl.u32 %v1961, 7
        %v1963 = vsub.s32 %v1960, %v1962
        %v1964 = vrot.slane %v1956, %v1963
        %v1966 = vunpack.c.l.s4 1983009808
        %v1967 = vunpack.c.0.s8 %v1966
        %v1968 = vlaneseq
        %v1969 = vshrl.u32 %v1968, 7
        %v1970 = vsub.s32 %v1967, %v1969
        %v1971 = vrot.slane %v1957, %v1970
        %v1972 = vcombine.low %v1953, %v1955
        %v1973 = vcombine.high %v1953, %v1955
        %v1975 = vunpack.c.l.s4 1983009808
        %v1976 = vunpack.c.0.s8 %v1975
        %v1977 = vlaneseq
        %v1978 = vshrl.u32 %v1977, 7
        %v1979 = vsub.s32 %v1976, %v1978
        %v1980 = vrot.slane %v1972, %v1979
        %v1982 = vunpack.c.l.s4 1983009808
        %v1983 = vunpack.c.0.s8 %v1982
        %v1984 = vlaneseq
        %v1985 = vshrl.u32 %v1984, 7
        %v1986 = vsub.s32 %v1983, %v1985
        %v1987 = vrot.slane %v1973, %v1986
        %v1988 = vcombine.low %v1964, %v1980
        %v1989 = vcombine.high %v1964, %v1980
        %v1991 = vunpack.c.l.s4 1934713408
        %v1992 = vunpack.c.0.s8 %v1991
        %v1993 = vlaneseq
        %v1994 = vshrl.u32 %v1993, 7
        %v1995 = vsub.s32 %v1992, %v1994
        %v1996 = vrot.slane %v1988, %v1995
        %v1998 = vunpack.c.l.s4 1934713408
        %v1999 = vunpack.c.0.s8 %v1998
        %v2000 = vlaneseq
        %v2001 = vshrl.u32 %v2000, 7
        %v2002 = vsub.s32 %v1999, %v2001
        %v2003 = vrot.slane %v1989, %v2002
        %v2004 = vcombine.low %v1971, %v1987
        %v2005 = vcombine.high %v1971, %v1987
        %v2007 = vunpack.c.l.s4 1934713408
        %v2008 = vunpack.c.0.s8 %v2007
        %v2009 = vlaneseq
        %v2010 = vshrl.u32 %v2009, 7
        %v2011 = vsub.s32 %v2008, %v2010
        %v2012 = vrot.slane %v2004, %v2011
        %v2014 = vunpack.c.l.s4 1934713408
        %v2015 = vunpack.c.0.s8 %v2014
        %v2016 = vlaneseq
        %v2017 = vshrl.u32 %v2016, 7
        %v2018 = vsub.s32 %v2015, %v2017
        %v2019 = vrot.slane %v2005, %v2018
        %v2020 = vcombine.high %v1996, 0.0
        %v2021 = vcombine.high %v2003, 0.0
        %v2022 = vcombine.high %v2012, 0.0
        %v2023 = vcombine.high %v2019, 0.0
        %v2024 = vcombine.low %v1996, %v2003
        %v2026 = vunpack.c.l.s4 1983009808
        %v2027 = vunpack.c.0.s8 %v2026
        %v2028 = vlaneseq
        %v2029 = vshrl.u32 %v2028, 7
        %v2030 = vsub.s32 %v2027, %v2029
        %v2031 = vrot.slane %v2024, %v2030
        %v2032 = vcombine.low %v2020, %v2021
        %v2034 = vunpack.c.l.s4 1983009808
        %v2035 = vunpack.c.0.s8 %v2034
        %v2036 = vlaneseq
        %v2037 = vshrl.u32 %v2036, 7
        %v2038 = vsub.s32 %v2035, %v2037
        %v2039 = vrot.slane %v2032, %v2038
        %v2040 = vcombine.low %v2012, %v2019
        %v2042 = vunpack.c.l.s4 1983009808
        %v2043 = vunpack.c.0.s8 %v2042
        %v2044 = vlaneseq
        %v2045 = vshrl.u32 %v2044, 7
        %v2046 = vsub.s32 %v2043, %v2045
        %v2047 = vrot.slane %v2040, %v2046
        %v2048 = vcombine.low %v2022, %v2023
        %v2050 = vunpack.c.l.s4 1983009808
        %v2051 = vunpack.c.0.s8 %v2050
        %v2052 = vlaneseq
        %v2053 = vshrl.u32 %v2052, 7
        %v2054 = vsub.s32 %v2051, %v2053
        %v2055 = vrot.slane %v2048, %v2054
        %v2056 = vcombine.low %v2031, %v2039
        %v2057 = vcombine.high %v2031, %v2039
        %v2059 = vunpack.c.l.s4 1934713408
        %v2060 = vunpack.c.0.s8 %v2059
        %v2061 = vlaneseq
        %v2062 = vshrl.u32 %v2061, 7
        %v2063 = vsub.s32 %v2060, %v2062
        %v2064 = vrot.slane %v2056, %v2063
        %v2066 = vunpack.c.l.s4 1934713408
        %v2067 = vunpack.c.0.s8 %v2066
        %v2068 = vlaneseq
        %v2069 = vshrl.u32 %v2068, 7
        %v2070 = vsub.s32 %v2067, %v2069
        %v2071 = vrot.slane %v2057, %v2070
        %v2072 = vcombine.low %v2047, %v2055
        %v2073 = vcombine.high %v2047, %v2055
        %v2075 = vunpack.c.l.s4 1934713408
        %v2076 = vunpack.c.0.s8 %v2075
        %v2077 = vlaneseq
        %v2078 = vshrl.u32 %v2077, 7
        %v2079 = vsub.s32 %v2076, %v2078
        %v2080 = vrot.slane %v2072, %v2079
        %v2082 = vunpack.c.l.s4 1934713408
        %v2083 = vunpack.c.0.s8 %v2082
        %v2084 = vlaneseq
        %v2085 = vshrl.u32 %v2084, 7
        %v2086 = vsub.s32 %v2083, %v2085
        %v2087 = vrot.slane %v2073, %v2086
        %v2088 = vcombine.low %v2064, %v2080
        %v2089 = vcombine.high %v2064, %v2080
        %v2090 = vcombine.low %v2071, %v2087
        %v2091 = vcombine.high %v2071, %v2087
        %2093 = vrot.lane.b32.xlu0 %v2089, 8
        %v2094 = vpop.permute.xlu0 %2093
        %2097 = vrot.lane.b32.xlu0 %v2090, 16
        %v2098 = vpop.permute.xlu0 %2097
        %2101 = vrot.lane.b32.xlu0 %v2091, 24
        %v2102 = vpop.permute.xlu0 %2101
        %v2104 = vsel %vm1503, %v2088, %v2094
        %v2105 = vsel %vm1703, %v2104, %v2098
        %vm2106 = vcmask 195584
        %v2107 = vsel %vm2106, %v2105, %v2102
        %v2108 = vpack.c.bf16 %v2107, %v2107
        %v2109 = vld [vmem:[#allocation7] sm:$0xf]
        %v2110 = vld [vmem:[#allocation7 + $0x4] sm:$0xf]
        %v2111 = vld [vmem:[#allocation7 + $0x8] sm:$0xf]
        %v2112 = vld [vmem:[#allocation7 + $0xc] sm:$0xf]
        %v2117 = vunpack.c.l.b16 %v2109
        %v2118 = vunpack.c.l.b16 %v2110
        %v2119 = vunpack.c.l.b16 %v2111
        %v2120 = vunpack.c.l.b16 %v2112
        %v2121 = vpack.c.b16 %v2118, %v2117
        %v2122 = vpack.c.b16 %v2120, %v2119
        %v2126 = vsel %vm1232, %v2108, 0
        %2128 = vmatprep.subr.bf16.mxu0 0
        %2129 = vmatpush1.bf16.msra.mxu0 0
        %2130 = vmatprep.subr.bf16.mxu0 0
        %2131 = vmatpush1.bf16.msra.mxu0 0
        %2132 = vmatprep.subr.bf16.mxu0 0
        %2133 = vmatpush1.bf16.msra.mxu0 0
        %2134 = vmatprep.subr.bf16.mxu0 0
        %2135 = vmatpush1.bf16.msra.mxu0 0
        %2136 = vmatprep.subr.bf16.mxu0 0
        %2137 = vmatpush1.bf16.msra.mxu0 0
        %2138 = vmatprep.subr.bf16.mxu0 0
        %2139 = vmatpush1.bf16.msra.mxu0 0
        %2140 = vmatprep.subr.bf16.mxu0 0
        %2141 = vmatpush1.bf16.msra.mxu0 %v2122
        %2142 = vmatprep.subr.bf16.mxu0 0
        %2143 = vmatpush1.bf16.msra.mxu0 %v2121
        %2144 = vmatprep.subr.bf16.mxu0 0
        %2145 = vmatpush2.bf16.msra.mxu0 0
        %2146 = vmatprep.subr.bf16.mxu0 0
        %2147 = vmatpush2.bf16.msra.mxu0 0
        %2148 = vmatprep.subr.bf16.mxu0 0
        %2149 = vmatpush2.bf16.msra.mxu0 0
        %2150 = vmatprep.subr.bf16.mxu0 0
        %2151 = vmatpush2.bf16.msra.mxu0 0
        %2152 = vmatprep.subr.bf16.mxu0 0
        %2153 = vmatpush2.bf16.msra.mxu0 0
        %2154 = vmatprep.subr.bf16.mxu0 0
        %2155 = vmatpush2.bf16.msra.mxu0 0
        %2156 = vmatprep.subr.bf16.mxu0 0
        %2157 = vmatpush2.bf16.msra.mxu0 0
        %2158 = vmatprep.subr.bf16.mxu0 0
        %2159 = vmatpush2.bf16.msra.mxu0 0
        %2160 = vmatprep.mubr.bf16.mxu0 0
        %2161 = vmatmul.mubr.bf16.gmra.mxu0 %v2126
        %v2162 = vpop.f32.mrf.mxu0
        %v2163 = vadd.f32 0.0, %v2162
        %v2164 = vpop.f32.mrf.mxu0
        %v2165 = vpop.f32.mrf.mxu0
        %v2166 = vpop.f32.mrf.mxu0
        %2167 = vdwg.mxu0
        %v2168 = vadd.f32 %v1231, %v2163
        %v2169 = vld [vmem:[#allocation9] sm:$0x1]
        %v2170 = vld [vmem:[#allocation10] sm:$0x1]
        %v2171 = vsel %vm1232, %v2168, 0.0
        %2172 = vadd.xlane.f32.xlu0 %v2171
        %v2173 = vpop.xlane.xlu0 %2172
        %v2174 = vmul.f32 %v2173, %v1236
        %v2175 = vsub.f32 %v2168, %v2174
        %v2176 = vmul.f32 %v2175, %v2175
        %v2177 = vsel %vm1232, %v2176, 0.0
        %2178 = vadd.xlane.f32.xlu0 %v2177
        %v2179 = vpop.xlane.xlu0 %2178
        %v2180 = vmul.f32 %v2179, %v1236
        %v2181 = vadd.f32 %v2180, 1e-06
        %v2182 = vrsqrt.pop %v2181
        %v2183 = vmul.f32 %v2175, %v2182
        %v2185 = vlaneseq
        %v2186 = vshrl.u32 %v2185, 7
        %v2187 = vsub.s32 0, %v2186
        %v2188 = vrot.slane %v2169, %v2187
        %v2190 = vmul.f32 %v2183, %v2188
        %v2192 = vlaneseq
        %v2193 = vshrl.u32 %v2192, 7
        %v2194 = vsub.s32 0, %v2193
        %v2195 = vrot.slane %v2170, %v2194
        %v2197 = vadd.f32 %v2190, %v2195
        %v2198 = vpack.c.bf16 %v2197, %v2197
        %v2199 = vld [vmem:[#allocation12] sm:$0xf]
        %v2200 = vld [vmem:[#allocation12 + $0x4] sm:$0xf]
        %v2201 = vld [vmem:[#allocation12 + $0x8] sm:$0xf]
        %v2202 = vld [vmem:[#allocation12 + $0xc] sm:$0xf]
        %v2203 = vld [vmem:[#allocation13] sm:$0x1]
        %v2205 = vlaneseq
        %v2206 = vshrl.u32 %v2205, 7
        %v2207 = vsub.s32 0, %v2206
        %v2208 = vrot.slane %v2203, %v2207
        %v2214 = vunpack.c.l.b16 %v2199
        %v2215 = vunpack.c.l.b16 %v2200
        %v2216 = vunpack.c.l.b16 %v2201
        %v2217 = vunpack.c.l.b16 %v2202
        %v2218 = vpack.c.b16 %v2215, %v2214
        %v2219 = vpack.c.b16 %v2217, %v2216
        %v2223 = vsel %vm1232, %v2198, 0
        %2225 = vmatprep.subr.bf16.mxu0 0
        %2226 = vmatpush1.bf16.msra.mxu0 0
        %2227 = vmatprep.subr.bf16.mxu0 0
        %2228 = vmatpush1.bf16.msra.mxu0 0
        %2229 = vmatprep.subr.bf16.mxu0 0
        %2230 = vmatpush1.bf16.msra.mxu0 0
        %2231 = vmatprep.subr.bf16.mxu0 0
        %2232 = vmatpush1.bf16.msra.mxu0 0
        %2233 = vmatprep.subr.bf16.mxu0 0
        %2234 = vmatpush1.bf16.msra.mxu0 0
        %2235 = vmatprep.subr.bf16.mxu0 0
        %2236 = vmatpush1.bf16.msra.mxu0 0
        %2237 = vmatprep.subr.bf16.mxu0 0
        %2238 = vmatpush1.bf16.msra.mxu0 %v2219
        %2239 = vmatprep.subr.bf16.mxu0 0
        %2240 = vmatpush1.bf16.msra.mxu0 %v2218
        %2241 = vmatprep.subr.bf16.mxu0 0
        %2242 = vmatpush2.bf16.msra.mxu0 0
        %2243 = vmatprep.subr.bf16.mxu0 0
        %2244 = vmatpush2.bf16.msra.mxu0 0
        %2245 = vmatprep.subr.bf16.mxu0 0
        %2246 = vmatpush2.bf16.msra.mxu0 0
        %2247 = vmatprep.subr.bf16.mxu0 0
        %2248 = vmatpush2.bf16.msra.mxu0 0
        %2249 = vmatprep.subr.bf16.mxu0 0
        %2250 = vmatpush2.bf16.msra.mxu0 0
        %2251 = vmatprep.subr.bf16.mxu0 0
        %2252 = vmatpush2.bf16.msra.mxu0 0
        %2253 = vmatprep.subr.bf16.mxu0 0
        %2254 = vmatpush2.bf16.msra.mxu0 0
        %2255 = vmatprep.subr.bf16.mxu0 0
        %2256 = vmatpush2.bf16.msra.mxu0 0
        %2257 = vmatprep.mubr.bf16.mxu0 0
        %2258 = vmatmul.mubr.bf16.gmra.mxu0 %v2223
        %v2259 = vpop.f32.mrf.mxu0
        %v2260 = vadd.f32 %v2208, %v2259
        %v2261 = vpop.f32.mrf.mxu0
        %v2262 = vpop.f32.mrf.mxu0
        %v2263 = vpop.f32.mrf.mxu0
        %2264 = vdwg.mxu0
        %v2265 = vmax.f32 %v2260, 0.0
        %v2266 = vpack.c.bf16 %v2265, %v2265
        %v2267 = vld [vmem:[%s10] sm:$0xf]
        %v2268 = vld [vmem:[%s10 + $0x4] sm:$0xf]
        %v2269 = vld [vmem:[%s10 + $0x8] sm:$0xf]
        %v2270 = vld [vmem:[%s10 + $0xc] sm:$0xf]
        %v2271 = vld [vmem:[%s10 + $0x10] sm:$0xf]
        %v2272 = vld [vmem:[%s10 + $0x14] sm:$0xf]
        %v2273 = vld [vmem:[%s10 + $0x18] sm:$0xf]
        %v2274 = vld [vmem:[%s10 + $0x1c] sm:$0xf]
        %v2275 = vld [vmem:[%s11] sm:$0x1]
        %v2277 = vlaneseq
        %v2278 = vshrl.u32 %v2277, 7
        %v2279 = vsub.s32 0, %v2278
        %v2280 = vrot.slane %v2275, %v2279
        %v2290 = vunpack.c.l.b16 %v2267
        %v2291 = vunpack.c.l.b16 %v2268
        %v2292 = vunpack.c.l.b16 %v2269
        %v2293 = vunpack.c.l.b16 %v2270
        %v2294 = vunpack.c.l.b16 %v2271
        %v2295 = vunpack.c.l.b16 %v2272
        %v2296 = vunpack.c.l.b16 %v2273
        %v2297 = vunpack.c.l.b16 %v2274
        %v2298 = vpack.c.b16 %v2291, %v2290
        %v2299 = vpack.c.b16 %v2293, %v2292
        %v2300 = vpack.c.b16 %v2295, %v2294
        %v2301 = vpack.c.b16 %v2297, %v2296
        %vm2306 = vcmask 523264
        %v2308 = vsel %vm2306, %v2266, 0
        %2310 = vmatprep.subr.bf16.mxu0 0
        %2311 = vmatpush1.bf16.msra.mxu0 0
        %2312 = vmatprep.subr.bf16.mxu0 0
        %2313 = vmatpush1.bf16.msra.mxu0 0
        %2314 = vmatprep.subr.bf16.mxu0 0
        %2315 = vmatpush1.bf16.msra.mxu0 0
        %2316 = vmatprep.subr.bf16.mxu0 0
        %2317 = vmatpush1.bf16.msra.mxu0 0
        %2318 = vmatprep.subr.bf16.mxu0 0
        %2319 = vmatpush1.bf16.msra.mxu0 %v2301
        %2320 = vmatprep.subr.bf16.mxu0 0
        %2321 = vmatpush1.bf16.msra.mxu0 %v2300
        %2322 = vmatprep.subr.bf16.mxu0 0
        %2323 = vmatpush1.bf16.msra.mxu0 %v2299
        %2324 = vmatprep.subr.bf16.mxu0 0
        %2325 = vmatpush1.bf16.msra.mxu0 %v2298
        %2326 = vmatprep.subr.bf16.mxu0 0
        %2327 = vmatpush2.bf16.msra.mxu0 0
        %2328 = vmatprep.subr.bf16.mxu0 0
        %2329 = vmatpush2.bf16.msra.mxu0 0
        %2330 = vmatprep.subr.bf16.mxu0 0
        %2331 = vmatpush2.bf16.msra.mxu0 0
        %2332 = vmatprep.subr.bf16.mxu0 0
        %2333 = vmatpush2.bf16.msra.mxu0 0
        %2334 = vmatprep.subr.bf16.mxu0 0
        %2335 = vmatpush2.bf16.msra.mxu0 0
        %2336 = vmatprep.subr.bf16.mxu0 0
        %2337 = vmatpush2.bf16.msra.mxu0 0
        %2338 = vmatprep.subr.bf16.mxu0 0
        %2339 = vmatpush2.bf16.msra.mxu0 0
        %2340 = vmatprep.subr.bf16.mxu0 0
        %2341 = vmatpush2.bf16.msra.mxu0 0
        %2342 = vmatprep.mubr.bf16.mxu0 0
        %2343 = vmatmul.mubr.bf16.gmra.mxu0 %v2308
        %v2344 = vpop.f32.mrf.mxu0
        %v2345 = vadd.f32 %v2280, %v2344
        %v2346 = vpop.f32.mrf.mxu0
        %v2347 = vpop.f32.mrf.mxu0
        %v2348 = vpop.f32.mrf.mxu0
        %2349 = vdwg.mxu0
        %v2350 = vadd.f32 %v2168, %v2345
        %2351 = vst.msk [vmem:[%s502] sm:$0xff] %vm1232, %v2350
        %s2352 = sand.u32 %s309, 1
        %s2353 = scalar_lea.sflag [#allocation6], %s2352
        %s2354 = sand.u32 %s309, 1
        %s2355 = smul.addr %s2354, 8
        %s2356 = scalar_lea.vmem [#allocation15], %s2355
        // Predicated region
        $region97: #{tpu_custom_call.1} parent=67 // pred_check
          %p2357 = pneg %p319
        $region98: #{tpu_custom_call.1} parent=67 // pred_check_branch
          %2359 = sbr.rel (%p2357) target = $region100
        $region99: #{tpu_custom_call.1} parent=67 // pred_region
          %s2361 = ssub.s32 128, 128
          %2362 = vsyncadd %s2353, %s2361
          %s2363 = smul.addr %s34, 2
          %s2364 = sadd.s32 %s35, %s2363
          %s2365 = smul.addr %s2364, 128
          %s2366 = scalar_lea.hbm %s12, %s2365
          %s2368 = sshll.u32 %s2356, 4
          %s2369 = int_to_ptr.vmem [resolvable:$true] %s2368
          %2371 = dma.vmem_to_hbm [thread:$0]  %s2369, 128, %s2366, %s2353
        $region100: #{tpu_custom_call.1} parent=67 // pred_fallthru
          _
      $region68: #{tpu_custom_call.1} parent=5 // pred_fallthru
        _
      %p2372 = scmp.le.s32.totalorder 2, %s25
      // Predicated region
      $region101: #{tpu_custom_call.1} parent=5 // pred_check
        %p2373 = pneg %p2372
      $region102: #{tpu_custom_call.1} parent=5 // pred_check_branch
        %2375 = sbr.rel (%p2373) target = $region104
      $region103: #{tpu_custom_call.1} parent=5 // pred_region
        %s2376 = ssub.s32 %s25, 2
        // Predicated region
        $region105: #{tpu_custom_call.1} parent=103 // pred_check
          %p2377 = pneg %p325
        $region106: #{tpu_custom_call.1} parent=103 // pred_check_branch
          %2379 = sbr.rel (%p2377) target = $region108
        $region107: #{tpu_custom_call.1} parent=103 // pred_region
          %s2380 = sand.u32 %s310, 1
          %s2381 = scalar_lea.sflag [#allocation6], %s2380
          %s2382 = sand.u32 %s310, 1
          %s2383 = smul.addr %s2382, 8
          %s2384 = scalar_lea.vmem [#allocation15], %s2383
          %2385 = dma.done %s2381, 128
        $region108: #{tpu_custom_call.1} parent=103 // pred_fallthru
          _
      $region104: #{tpu_custom_call.1} parent=5 // pred_fallthru
        _
    $region6: #{tpu_custom_call.1} parent=1 // loop_footer
      %s29 = sadd.s32 1, %s25
    $region7: #{tpu_custom_call.1} parent=1 // loop_footer_branch
      %24 = sbr.rel target = $region3
    $region8: #{tpu_custom_call.1} parent=1 // loop_exit
      _
    %2386 = vsyncpa [#allocation5], 1
    %s2387 = scalar_lea.sflag [#allocation5], 1
    %2388 = vsyncpa %s2387, 1
    %2389 = vsyncpa [#allocation8], 1
    %2390 = vsyncpa [#allocation11], 1
    %2391 = vsyncpa [#allocation14], 1
    %2392 = vsyncpa [#allocation6], 1
    %s2393 = scalar_lea.sflag [#allocation6], 1
    %2394 = vsyncpa %s2393, 1

</llo_original>
